<compile_context>
chip_gen: v7x
topology: tpu7x:2x2x1
jax: 0.10.0
libtpu: 0.0.40
codegen_flags: <defaults>
</compile_context>

<pallas_src>
import functools

import numpy as np
import jax
import jax.numpy as jnp
from jax.experimental import pallas as pl
from jax.experimental.pallas import tpu as pltpu


# MXU operand dtype: bf16 inputs with f32 accumulation (flip to jnp.float32
# for bit-exact f32 matmuls).  Elementwise adds stay f32.
MXU_DTYPE = jnp.bfloat16

_PARALLEL = pltpu.CompilerParams(dimension_semantics=("parallel",))


def _mxu_dot(a, b):
    """MXU matmul: cast operands in-kernel, accumulate in f32."""
    return jnp.dot(a.astype(MXU_DTYPE), b.astype(MXU_DTYPE),
                   preferred_element_type=jnp.float32)


def _rep_spec(shape):
    """Whole-array block, same block every grid step (weights / constants)."""
    return pl.BlockSpec(shape, lambda b: (0,) * len(shape))


def _bat_spec(rows, cols):
    """Per-batch block (1, rows, cols) of a [B, rows, cols] array."""
    return pl.BlockSpec((1, rows, cols), lambda b: (b, 0, 0))


# ----------------------------- kernel factories ------------------------------

def make_input_stage_call(batch, seq_len, input_dim, hidden_dim,
                          scale_factors, input_lens):
    """Fused: shared input projection + window-mean downsample for every scale."""
    n = len(scale_factors)
    ds_scales = [k for k, sf in enumerate(scale_factors) if sf != 1]
    n_ds = len(ds_scales)

    def kernel(*refs):
        x_ref, w_ref, b_ref = refs[0], refs[1], refs[2]
        d_refs = refs[3:3 + n_ds]
        out_refs = refs[3 + n_ds:]
        x = x_ref[0]                                       # [S, C] (one batch)
        p = _mxu_dot(x, w_ref[...]) + b_ref[...]           # [S, H] shared projection
        di = 0
        for k in range(n):
            if scale_factors[k] == 1:
                out_refs[k][0] = p.astype(out_refs[k].dtype)
            else:
                # window-mean downsample as a left matmul on the projected seq
                # (mean-pool and linear projection commute exactly).
                out_refs[k][0] = _mxu_dot(d_refs[di][...], p).astype(out_refs[k].dtype)
                di += 1

    in_specs = [_bat_spec(seq_len, input_dim),
                _rep_spec((input_dim, hidden_dim)),
                _rep_spec((1, hidden_dim))]
    in_specs += [_rep_spec((input_lens[k], seq_len)) for k in ds_scales]
    out_specs = tuple(_bat_spec(input_lens[k], hidden_dim) for k in range(n))
    out_shape = tuple(jax.ShapeDtypeStruct((batch, input_lens[k], hidden_dim),
                                           jnp.float32) for k in range(n))
    call = pl.pallas_call(kernel, grid=(batch,), in_specs=in_specs,
                          out_specs=out_specs, out_shape=out_shape,
                          compiler_params=_PARALLEL)
    return call, ds_scales


def make_pdm_call(batch, hidden_dim, input_lens):
    """Fused PastDecomposableMixer layer (all scales, decomp+mix+residual)."""
    n = len(input_lens)
    n_in = n + 1 + n * n      # xs + out_w + per-scale (rb + (n-1) cross mats)

    def kernel(*refs):
        x_refs = refs[:n]
        w_ref = refs[n]
        rest = refs[n + 1:n_in]
        out_refs = refs[n_in:]
        xs = [x_refs[i][0] for i in range(n)]              # [T_i, H] per scale
        w = w_ref[...]                                     # [H, H] shared channel mix
        idx = 0
        for i in range(n):
            rb = rest[idx][...]                            # folded residual bias [T_i, H]
            idx += 1
            # season_i + trend_i own-scale term == x_i  (since (I-A)+A = I)
            mix = xs[i]
            for j in range(n):
                if j == i:
                    continue
                mix = mix + _mxu_dot(rest[idx][...], xs[j])   # [T_i,T_j] @ [T_j,H]
                idx += 1
            out = xs[i] + _mxu_dot(mix, w) + rb
            out_refs[i][0] = out.astype(out_refs[i].dtype)

    in_specs = [_bat_spec(input_lens[i], hidden_dim) for i in range(n)]
    in_specs.append(_rep_spec((hidden_dim, hidden_dim)))
    for i in range(n):
        in_specs.append(_rep_spec((input_lens[i], hidden_dim)))
        for j in range(n):
            if j == i:
                continue
            in_specs.append(_rep_spec((input_lens[i], input_lens[j])))
    out_specs = tuple(_bat_spec(input_lens[i], hidden_dim) for i in range(n))
    out_shape = tuple(jax.ShapeDtypeStruct((batch, input_lens[i], hidden_dim),
                                           jnp.float32) for i in range(n))
    return pl.pallas_call(kernel, grid=(batch,), in_specs=in_specs,
                          out_specs=out_specs, out_shape=out_shape,
                          input_output_aliases={i: i for i in range(n)},
                          compiler_params=_PARALLEL)


def make_fmm_call(batch, hidden_dim, input_lens, pred_len, output_dim):
    """Fused FutureMixingModule: per-scale predictors + out proj + mean ensemble."""
    n = len(input_lens)

    def kernel(*refs):
        x_refs = refs[:n]
        p_refs = refs[n:2 * n]
        wo_ref = refs[2 * n]
        fb_ref = refs[2 * n + 1]
        out_ref = refs[2 * n + 2]
        acc = _mxu_dot(p_refs[0][...], x_refs[0][0])           # [pred_len, H]
        for i in range(1, n):
            acc = acc + _mxu_dot(p_refs[i][...], x_refs[i][0])
        out_ref[0] = (_mxu_dot(acc, wo_ref[...]) + fb_ref[...]).astype(out_ref.dtype)

    in_specs = [_bat_spec(input_lens[i], hidden_dim) for i in range(n)]
    in_specs += [_rep_spec((pred_len, input_lens[i])) for i in range(n)]
    in_specs += [_rep_spec((hidden_dim, output_dim)),
                 _rep_spec((pred_len, output_dim))]
    out_specs = _bat_spec(pred_len, output_dim)
    out_shape = jax.ShapeDtypeStruct((batch, pred_len, output_dim), jnp.float32)
    return pl.pallas_call(kernel, grid=(batch,), in_specs=in_specs,
                          out_specs=out_specs, out_shape=out_shape,
                          compiler_params=_PARALLEL)


# ------------------------- trace-time static matrices ------------------------

def build_decomp_matrix(T, kernel_sizes):
    """A (average of moving-average matrices, replicate padding).
    Channel-last: trend_b = A @ x_b, season_b = (I - A) @ x_b."""
    mats = []
    for k in kernel_sizes:
        pad = (k - 1) // 2
        A = np.zeros((T, T), np.float32)
        for t in range(T):
            for j in range(k):
                s = min(max(t + j - pad, 0), T - 1)
                A[t, s] += 1.0 / k
        mats.append(A)
    return np.mean(np.stack(mats, 0), axis=0)


def build_downsample_matrix(seq_len, sf):
    """D: window-mean downsample, ds_b = D @ x_b (== reshape(...,sf).mean(2))."""
    t_out = seq_len // sf
    D = np.zeros((t_out, seq_len), np.float32)
    for t in range(t_out):
        D[t, t * sf:(t + 1) * sf] = 1.0 / sf
    return D


# -------------------- trace-time algebraic weight folding --------------------

def fold_pdm_layer(layer, A_list, input_lens):
    """Fold decomposition + cascaded season/trend Linear mixing into direct
    per-(target,source) left-multiply matrices and a per-scale residual bias."""
    n = len(A_list)
    Ws, bs = layer['season_w'], layer['season_b']     # Ws_i: [T_i, T_{i+1}]
    Wt, bt = layer['trend_w'], layer['trend_b']       # Wt_i: [T_{i+1}, T_i]

    # season (bottom-up cascade): s_i = (I-A_i) x_i + sum_{j<i} LS[i][j] x_j + csb_i
    LS = [dict() for _ in range(n)]
    csb = [None] * n
    carry, cb = {}, jnp.zeros((input_lens[0],), jnp.float32)
    for i in range(n):
        if i > 0:
            WsT = Ws[i - 1].T                                    # [T_i, T_{i-1}]
            carry = {j: WsT @ m for j, m in carry.items()}
            carry[i - 1] = WsT @ (jnp.eye(input_lens[i - 1]) - A_list[i - 1])
            cb = WsT @ cb + bs[i - 1]
        LS[i] = dict(carry)
        csb[i] = cb

    # trend (top-down cascade): t_i = A_i x_i + sum_{j>i} LT[i][j] x_j + ctb_i
    LT = [dict() for _ in range(n)]
    ctb = [None] * n
    carry, cb = {}, jnp.zeros((input_lens[n - 1],), jnp.float32)
    for i in range(n - 1, -1, -1):
        if i < n - 1:
            WtT = Wt[i].T                                        # [T_i, T_{i+1}]
            carry = {j: WtT @ m for j, m in carry.items()}
            carry[i + 1] = WtT @ A_list[i + 1]
            cb = WtT @ cb + bt[i]
        LT[i] = dict(carry)
        ctb[i] = cb

    # out_i = x_i + (x_i + cross_i) @ W_out + rb_i
    # rb_i folds the (time-axis) mixing biases through W_out's column sums + b_out.
    out_w, out_b = layer['out_w'], layer['out_b']
    col = jnp.sum(out_w, axis=0)                                 # [H]
    args = []
    for i in range(n):
        tb = csb[i] + ctb[i]                                     # [T_i]
        args.append(tb[:, None] * col[None, :] + out_b[None, :])  # rb_i [T_i, H]
        for j in range(n):
            if j == i:
                continue
            args.append(LS[i][j] if j < i else LT[i][j])         # [T_i, T_j]
    return args


def fold_fmm(fmm, input_lens):
    """Fold per-scale predictors + shared output projection + mean ensemble."""
    n = len(input_lens)
    P = [fmm['pred_w'][i].T / float(n) for i in range(n)]        # [pred_len, T_i]
    wo, bo = fmm['out_w'], fmm['out_b']
    mean_pb = sum(fmm['pred_b']) / float(n)                      # [pred_len]
    fb = mean_pb[:, None] * jnp.sum(wo, axis=0)[None, :] + bo[None, :]
    return P, wo, fb                                             # fb: [pred_len, O]


# --------------------------------- parameters --------------------------------

def init_params(key, input_dim, output_dim, seq_len, pred_len, hidden_dim,
                num_layers, scale_factors):
    input_lens = [seq_len // sf for sf in scale_factors]
    keys = list(jax.random.split(key, 64))
    kit = iter(keys)

    def dense(shape, scale=0.05):
        return jax.random.normal(next(kit), shape, jnp.float32) * scale

    params = {
        'proj_w': dense((input_dim, hidden_dim)),
        'proj_b': jnp.zeros((hidden_dim,), jnp.float32),
        'pdm': [],
        'fmm': {},
    }
    n = len(input_lens)
    for _ in range(num_layers):
        layer = {
            'season_w': [dense((input_lens[i], input_lens[i + 1]))
                         for i in range(n - 1)],
            'season_b': [jnp.zeros((input_lens[i + 1],), jnp.float32)
                         for i in range(n - 1)],
            'trend_w': [dense((input_lens[i + 1], input_lens[i]))
                        for i in range(n - 1)],
            'trend_b': [jnp.zeros((input_lens[i],), jnp.float32)
                        for i in range(n - 1)],
            'out_w': dense((hidden_dim, hidden_dim)),
            'out_b': jnp.zeros((hidden_dim,), jnp.float32),
        }
        params['pdm'].append(layer)
    params['fmm'] = {
        'pred_w': [dense((input_lens[i], pred_len)) for i in range(n)],
        'pred_b': [jnp.zeros((pred_len,), jnp.float32) for _ in range(n)],
        'out_w': dense((hidden_dim, output_dim)),
        'out_b': jnp.zeros((output_dim,), jnp.float32),
    }
    return params


# ---------------------------------- forward ----------------------------------

def timemixer_forward(params, x, *, seq_len, hidden_dim, scale_factors,
                      kernel_sizes, pred_len, output_dim):
    """x: [batch, seq_len, input_dim]  ->  [batch, pred_len, output_dim]"""
    batch, _, input_dim = x.shape
    input_lens = [seq_len // sf for sf in scale_factors]
    A_list = [jnp.asarray(build_decomp_matrix(T, kernel_sizes)) for T in input_lens]

    # stage 1: fused multi-scale downsample + shared input projection (1 kernel)
    in_call, ds_scales = make_input_stage_call(batch, seq_len, input_dim,
                                               hidden_dim, scale_factors, input_lens)
    d_mats = [jnp.asarray(build_downsample_matrix(seq_len, scale_factors[k]))
              for k in ds_scales]
    x_ms = list(in_call(x.astype(jnp.float32), params['proj_w'],
                        params['proj_b'].reshape(1, hidden_dim), *d_mats))

    # stage 2: Past Decomposable Mixing stack (1 fused kernel per layer)
    pdm_call = make_pdm_call(batch, hidden_dim, input_lens)
    for layer in params['pdm']:
        folded = fold_pdm_layer(layer, A_list, input_lens)
        x_ms = list(pdm_call(*x_ms, layer['out_w'], *folded))

    # stage 3: fused Future Mixing Module (1 kernel)
    P, wo, fb = fold_fmm(params['fmm'], input_lens)
    fmm_call = make_fmm_call(batch, hidden_dim, input_lens, pred_len, output_dim)
    return fmm_call(*x_ms, *P, wo, fb)


# ---------------------------------- driver -----------------------------------

if __name__ == "__main__":
    batch = 2
    input_dim = 4
    output_dim = 4
    seq_len = 16
    pred_len = 8
    hidden_dim = 32
    num_layers = 2
    scale_factors = [1, 2, 4]
    kernel_sizes = [5, 9, 13]

    key = jax.random.PRNGKey(0)
    kp, kx = jax.random.split(key)
    params = init_params(kp, input_dim, output_dim, seq_len, pred_len,
                         hidden_dim, num_layers, scale_factors)
    x = jax.random.normal(kx, (batch, seq_len, input_dim), jnp.float32)

    fwd = functools.partial(
        timemixer_forward,
        seq_len=seq_len, hidden_dim=hidden_dim, scale_factors=scale_factors,
        kernel_sizes=kernel_sizes, pred_len=pred_len, output_dim=output_dim)

    out = jax.jit(fwd)(params, x)
    out = jax.block_until_ready(out)
    assert out.shape == (batch, pred_len, output_dim), out.shape
    assert jnp.all(jnp.isfinite(out))
    print("KERNEL_OK")
</pallas_src>

<mosaic_0001>
module attributes {stable_mosaic.version = 11 : i64} {
  func.func @kernel(%arg0: i32, %arg1: memref<1x16x4xf32, #tpu.memory_space<vmem>>, %arg2: memref<4x32xf32, #tpu.memory_space<vmem>>, %arg3: memref<1x32xf32, #tpu.memory_space<vmem>>, %arg4: memref<8x16xf32, #tpu.memory_space<vmem>>, %arg5: memref<4x16xf32, #tpu.memory_space<vmem>>, %arg6: memref<1x16x32xf32, #tpu.memory_space<vmem>>, %arg7: memref<1x8x32xf32, #tpu.memory_space<vmem>>, %arg8: memref<1x4x32xf32, #tpu.memory_space<vmem>>) attributes {dimension_semantics = [#tpu.dimension_semantics<parallel>], iteration_bounds = array<i64: 2>, scalar_prefetch = 0 : i64, scratch_operands = 0 : i64, tpu.core_type = #tpu.core_type<tc>, window_params = [{transform_indices = @transform_0, window_bounds = array<i64: 1, 16, 4>}, {pipeline_mode = #tpu.pipeline_mode<synchronous>, transform_indices = @transform_1, window_bounds = array<i64: 4, 32>}, {pipeline_mode = #tpu.pipeline_mode<synchronous>, transform_indices = @transform_2, window_bounds = array<i64: 1, 32>}, {pipeline_mode = #tpu.pipeline_mode<synchronous>, transform_indices = @transform_3, window_bounds = array<i64: 8, 16>}, {pipeline_mode = #tpu.pipeline_mode<synchronous>, transform_indices = @transform_4, window_bounds = array<i64: 4, 16>}, {transform_indices = @transform_5, window_bounds = array<i64: 1, 16, 32>}, {transform_indices = @transform_6, window_bounds = array<i64: 1, 8, 32>}, {transform_indices = @transform_7, window_bounds = array<i64: 1, 4, 32>}]} {
    %c0 = arith.constant 0 : index
    %c0_0 = arith.constant 0 : index
    %c0_1 = arith.constant 0 : index
    %0 = vector.load %arg1[%c0, %c0_0, %c0_1] : memref<1x16x4xf32, #tpu.memory_space<vmem>>, vector<1x16x4xf32>
    %1 = vector.shape_cast %0 : vector<1x16x4xf32> to vector<16x4xf32>
    %c0_2 = arith.constant 0 : index
    %c0_3 = arith.constant 0 : index
    %2 = vector.load %arg2[%c0_2, %c0_3] : memref<4x32xf32, #tpu.memory_space<vmem>>, vector<4x32xf32>
    %3 = arith.truncf %1 : vector<16x4xf32> to vector<16x4xbf16>
    %4 = arith.truncf %2 : vector<4x32xf32> to vector<4x32xbf16>
    %cst = arith.constant dense<0.000000e+00> : vector<16x32xf32>
    %5 = tpu.matmul %3, %4, %cst {dimension_numbers = #tpu.dot_dimension_numbers<[1], [0], [0], [1], [0, 0, 1, 1], [], []>} : vector<16x4xbf16>, vector<4x32xbf16>, vector<16x32xf32> -> vector<16x32xf32>
    %c0_4 = arith.constant 0 : index
    %c0_5 = arith.constant 0 : index
    %6 = vector.load %arg3[%c0_4, %c0_5] : memref<1x32xf32, #tpu.memory_space<vmem>>, vector<1x32xf32>
    %7 = vector.broadcast %6 : vector<1x32xf32> to vector<16x32xf32>
    %8 = arith.addf %5, %7 : vector<16x32xf32>
    %c0_6 = arith.constant 0 : index
    %c0_7 = arith.constant 0 : index
    %c0_8 = arith.constant 0 : index
    %9 = vector.load %arg6[%c0_6, %c0_7, %c0_8] : memref<1x16x32xf32, #tpu.memory_space<vmem>>, vector<1x16x32xf32>
    %10 = vector.shape_cast %9 : vector<1x16x32xf32> to vector<16x32xf32>
    %11 = vector.shape_cast %8 : vector<16x32xf32> to vector<1x16x32xf32>
    tpu.vector_store %arg6[%c0_6, %c0_7, %c0_8], %11 {strides = array<i32>} : memref<1x16x32xf32, #tpu.memory_space<vmem>>, vector<1x16x32xf32>,
    %c0_9 = arith.constant 0 : index
    %c0_10 = arith.constant 0 : index
    %12 = vector.load %arg4[%c0_9, %c0_10] : memref<8x16xf32, #tpu.memory_space<vmem>>, vector<8x16xf32>
    %13 = arith.truncf %12 : vector<8x16xf32> to vector<8x16xbf16>
    %14 = arith.truncf %8 : vector<16x32xf32> to vector<16x32xbf16>
    %cst_11 = arith.constant dense<0.000000e+00> : vector<8x32xf32>
    %15 = tpu.matmul %13, %14, %cst_11 {dimension_numbers = #tpu.dot_dimension_numbers<[1], [0], [0], [1], [0, 0, 1, 1], [], []>} : vector<8x16xbf16>, vector<16x32xbf16>, vector<8x32xf32> -> vector<8x32xf32>
    %c0_12 = arith.constant 0 : index
    %c0_13 = arith.constant 0 : index
    %c0_14 = arith.constant 0 : index
    %16 = vector.load %arg7[%c0_12, %c0_13, %c0_14] : memref<1x8x32xf32, #tpu.memory_space<vmem>>, vector<1x8x32xf32>
    %17 = vector.shape_cast %16 : vector<1x8x32xf32> to vector<8x32xf32>
    %18 = vector.shape_cast %15 : vector<8x32xf32> to vector<1x8x32xf32>
    tpu.vector_store %arg7[%c0_12, %c0_13, %c0_14], %18 {strides = array<i32>} : memref<1x8x32xf32, #tpu.memory_space<vmem>>, vector<1x8x32xf32>,
    %c0_15 = arith.constant 0 : index
    %c0_16 = arith.constant 0 : index
    %19 = vector.load %arg5[%c0_15, %c0_16] : memref<4x16xf32, #tpu.memory_space<vmem>>, vector<4x16xf32>
    %20 = arith.truncf %19 : vector<4x16xf32> to vector<4x16xbf16>
    %21 = arith.truncf %8 : vector<16x32xf32> to vector<16x32xbf16>
    %cst_17 = arith.constant dense<0.000000e+00> : vector<4x32xf32>
    %22 = tpu.matmul %20, %21, %cst_17 {dimension_numbers = #tpu.dot_dimension_numbers<[1], [0], [0], [1], [0, 0, 1, 1], [], []>} : vector<4x16xbf16>, vector<16x32xbf16>, vector<4x32xf32> -> vector<4x32xf32>
    %c0_18 = arith.constant 0 : index
    %c0_19 = arith.constant 0 : index
    %c0_20 = arith.constant 0 : index
    %23 = vector.load %arg8[%c0_18, %c0_19, %c0_20] : memref<1x4x32xf32, #tpu.memory_space<vmem>>, vector<1x4x32xf32>
    %24 = vector.shape_cast %23 : vector<1x4x32xf32> to vector<4x32xf32>
    %25 = vector.shape_cast %22 : vector<4x32xf32> to vector<1x4x32xf32>
    tpu.vector_store %arg8[%c0_18, %c0_19, %c0_20], %25 {strides = array<i32>} : memref<1x4x32xf32, #tpu.memory_space<vmem>>, vector<1x4x32xf32>,
    return
  }
  func.func @transform_0(%arg0: i32) -> (i32, i32, i32) {
    %c0_i32 = arith.constant 0 : i32
    %c0_i32_0 = arith.constant 0 : i32
    %c0_i32_1 = arith.constant 0 : i32
    return %arg0, %c0_i32, %c0_i32_0 : i32, i32, i32
  }
  func.func @transform_1(%arg0: i32) -> (i32, i32) {
    %c0_i32 = arith.constant 0 : i32
    %c0_i32_0 = arith.constant 0 : i32
    %c0_i32_1 = arith.constant 0 : i32
    return %c0_i32, %c0_i32_0 : i32, i32
  }
  func.func @transform_2(%arg0: i32) -> (i32, i32) {
    %c0_i32 = arith.constant 0 : i32
    %c0_i32_0 = arith.constant 0 : i32
    %c0_i32_1 = arith.constant 0 : i32
    return %c0_i32, %c0_i32_0 : i32, i32
  }
  func.func @transform_3(%arg0: i32) -> (i32, i32) {
    %c0_i32 = arith.constant 0 : i32
    %c0_i32_0 = arith.constant 0 : i32
    %c0_i32_1 = arith.constant 0 : i32
    return %c0_i32, %c0_i32_0 : i32, i32
  }
  func.func @transform_4(%arg0: i32) -> (i32, i32) {
    %c0_i32 = arith.constant 0 : i32
    %c0_i32_0 = arith.constant 0 : i32
    %c0_i32_1 = arith.constant 0 : i32
    return %c0_i32, %c0_i32_0 : i32, i32
  }
  func.func @transform_5(%arg0: i32) -> (i32, i32, i32) {
    %c0_i32 = arith.constant 0 : i32
    %c0_i32_0 = arith.constant 0 : i32
    %c0_i32_1 = arith.constant 0 : i32
    return %arg0, %c0_i32, %c0_i32_0 : i32, i32, i32
  }
  func.func @transform_6(%arg0: i32) -> (i32, i32, i32) {
    %c0_i32 = arith.constant 0 : i32
    %c0_i32_0 = arith.constant 0 : i32
    %c0_i32_1 = arith.constant 0 : i32
    return %arg0, %c0_i32, %c0_i32_0 : i32, i32, i32
  }
  func.func @transform_7(%arg0: i32) -> (i32, i32, i32) {
    %c0_i32 = arith.constant 0 : i32
    %c0_i32_0 = arith.constant 0 : i32
    %c0_i32_1 = arith.constant 0 : i32
    return %arg0, %c0_i32, %c0_i32_0 : i32, i32, i32
  }
}

module attributes {stable_mosaic.version = 11 : i64} {
  func.func @kernel(%arg0: i32, %arg1: memref<1x16x32xf32, #tpu.memory_space<vmem>>, %arg2: memref<1x8x32xf32, #tpu.memory_space<vmem>>, %arg3: memref<1x4x32xf32, #tpu.memory_space<vmem>>, %arg4: memref<32x32xf32, #tpu.memory_space<vmem>>, %arg5: memref<16x32xf32, #tpu.memory_space<vmem>>, %arg6: memref<16x8xf32, #tpu.memory_space<vmem>>, %arg7: memref<16x4xf32, #tpu.memory_space<vmem>>, %arg8: memref<8x32xf32, #tpu.memory_space<vmem>>, %arg9: memref<8x16xf32, #tpu.memory_space<vmem>>, %arg10: memref<8x4xf32, #tpu.memory_space<vmem>>, %arg11: memref<4x32xf32, #tpu.memory_space<vmem>>, %arg12: memref<4x16xf32, #tpu.memory_space<vmem>>, %arg13: memref<4x8xf32, #tpu.memory_space<vmem>>, %arg14: memref<1x16x32xf32, #tpu.memory_space<vmem>>, %arg15: memref<1x8x32xf32, #tpu.memory_space<vmem>>, %arg16: memref<1x4x32xf32, #tpu.memory_space<vmem>>) attributes {dimension_semantics = [#tpu.dimension_semantics<parallel>], iteration_bounds = array<i64: 2>, scalar_prefetch = 0 : i64, scratch_operands = 0 : i64, tpu.core_type = #tpu.core_type<tc>, window_params = [{transform_indices = @transform_0, window_bounds = array<i64: 1, 16, 32>}, {transform_indices = @transform_1, window_bounds = array<i64: 1, 8, 32>}, {transform_indices = @transform_2, window_bounds = array<i64: 1, 4, 32>}, {pipeline_mode = #tpu.pipeline_mode<synchronous>, transform_indices = @transform_3, window_bounds = array<i64: 32, 32>}, {pipeline_mode = #tpu.pipeline_mode<synchronous>, transform_indices = @transform_4, window_bounds = array<i64: 16, 32>}, {pipeline_mode = #tpu.pipeline_mode<synchronous>, transform_indices = @transform_5, window_bounds = array<i64: 16, 8>}, {pipeline_mode = #tpu.pipeline_mode<synchronous>, transform_indices = @transform_6, window_bounds = array<i64: 16, 4>}, {pipeline_mode = #tpu.pipeline_mode<synchronous>, transform_indices = @transform_7, window_bounds = array<i64: 8, 32>}, {pipeline_mode = #tpu.pipeline_mode<synchronous>, transform_indices = @transform_8, window_bounds = array<i64: 8, 16>}, {pipeline_mode = #tpu.pipeline_mode<synchronous>, transform_indices = @transform_9, window_bounds = array<i64: 8, 4>}, {pipeline_mode = #tpu.pipeline_mode<synchronous>, transform_indices = @transform_10, window_bounds = array<i64: 4, 32>}, {pipeline_mode = #tpu.pipeline_mode<synchronous>, transform_indices = @transform_11, window_bounds = array<i64: 4, 16>}, {pipeline_mode = #tpu.pipeline_mode<synchronous>, transform_indices = @transform_12, window_bounds = array<i64: 4, 8>}, {transform_indices = @transform_13, window_bounds = array<i64: 1, 16, 32>}, {transform_indices = @transform_14, window_bounds = array<i64: 1, 8, 32>}, {transform_indices = @transform_15, window_bounds = array<i64: 1, 4, 32>}]} {
    %c0 = arith.constant 0 : index
    %c0_0 = arith.constant 0 : index
    %c0_1 = arith.constant 0 : index
    %0 = vector.load %arg1[%c0, %c0_0, %c0_1] : memref<1x16x32xf32, #tpu.memory_space<vmem>>, vector<1x16x32xf32>
    %1 = vector.shape_cast %0 : vector<1x16x32xf32> to vector<16x32xf32>
    %c0_2 = arith.constant 0 : index
    %c0_3 = arith.constant 0 : index
    %c0_4 = arith.constant 0 : index
    %2 = vector.load %arg2[%c0_2, %c0_3, %c0_4] : memref<1x8x32xf32, #tpu.memory_space<vmem>>, vector<1x8x32xf32>
    %3 = vector.shape_cast %2 : vector<1x8x32xf32> to vector<8x32xf32>
    %c0_5 = arith.constant 0 : index
    %c0_6 = arith.constant 0 : index
    %c0_7 = arith.constant 0 : index
    %4 = vector.load %arg3[%c0_5, %c0_6, %c0_7] : memref<1x4x32xf32, #tpu.memory_space<vmem>>, vector<1x4x32xf32>
    %5 = vector.shape_cast %4 : vector<1x4x32xf32> to vector<4x32xf32>
    %c0_8 = arith.constant 0 : index
    %c0_9 = arith.constant 0 : index
    %6 = vector.load %arg4[%c0_8, %c0_9] : memref<32x32xf32, #tpu.memory_space<vmem>>, vector<32x32xf32>
    %c0_10 = arith.constant 0 : index
    %c0_11 = arith.constant 0 : index
    %7 = vector.load %arg5[%c0_10, %c0_11] : memref<16x32xf32, #tpu.memory_space<vmem>>, vector<16x32xf32>
    %c0_12 = arith.constant 0 : index
    %c0_13 = arith.constant 0 : index
    %8 = vector.load %arg6[%c0_12, %c0_13] : memref<16x8xf32, #tpu.memory_space<vmem>>, vector<16x8xf32>
    %9 = arith.truncf %8 : vector<16x8xf32> to vector<16x8xbf16>
    %10 = arith.truncf %3 : vector<8x32xf32> to vector<8x32xbf16>
    %cst = arith.constant dense<0.000000e+00> : vector<16x32xf32>
    %11 = tpu.matmul %9, %10, %cst {dimension_numbers = #tpu.dot_dimension_numbers<[1], [0], [0], [1], [0, 0, 1, 1], [], []>} : vector<16x8xbf16>, vector<8x32xbf16>, vector<16x32xf32> -> vector<16x32xf32>
    %12 = arith.addf %1, %11 : vector<16x32xf32>
    %c0_14 = arith.constant 0 : index
    %c0_15 = arith.constant 0 : index
    %13 = vector.load %arg7[%c0_14, %c0_15] : memref<16x4xf32, #tpu.memory_space<vmem>>, vector<16x4xf32>
    %14 = arith.truncf %13 : vector<16x4xf32> to vector<16x4xbf16>
    %15 = arith.truncf %5 : vector<4x32xf32> to vector<4x32xbf16>
    %cst_16 = arith.constant dense<0.000000e+00> : vector<16x32xf32>
    %16 = tpu.matmul %14, %15, %cst_16 {dimension_numbers = #tpu.dot_dimension_numbers<[1], [0], [0], [1], [0, 0, 1, 1], [], []>} : vector<16x4xbf16>, vector<4x32xbf16>, vector<16x32xf32> -> vector<16x32xf32>
    %17 = arith.addf %12, %16 : vector<16x32xf32>
    %18 = arith.truncf %17 : vector<16x32xf32> to vector<16x32xbf16>
    %19 = arith.truncf %6 : vector<32x32xf32> to vector<32x32xbf16>
    %cst_17 = arith.constant dense<0.000000e+00> : vector<16x32xf32>
    %20 = tpu.matmul %18, %19, %cst_17 {dimension_numbers = #tpu.dot_dimension_numbers<[1], [0], [0], [1], [0, 0, 1, 1], [], []>} : vector<16x32xbf16>, vector<32x32xbf16>, vector<16x32xf32> -> vector<16x32xf32>
    %21 = arith.addf %1, %20 : vector<16x32xf32>
    %22 = arith.addf %21, %7 : vector<16x32xf32>
    %c0_18 = arith.constant 0 : index
    %c0_19 = arith.constant 0 : index
    %c0_20 = arith.constant 0 : index
    %23 = vector.load %arg14[%c0_18, %c0_19, %c0_20] : memref<1x16x32xf32, #tpu.memory_space<vmem>>, vector<1x16x32xf32>
    %24 = vector.shape_cast %23 : vector<1x16x32xf32> to vector<16x32xf32>
    %25 = vector.shape_cast %22 : vector<16x32xf32> to vector<1x16x32xf32>
    tpu.vector_store %arg14[%c0_18, %c0_19, %c0_20], %25 {strides = array<i32>} : memref<1x16x32xf32, #tpu.memory_space<vmem>>, vector<1x16x32xf32>,
    %c0_21 = arith.constant 0 : index
    %c0_22 = arith.constant 0 : index
    %26 = vector.load %arg8[%c0_21, %c0_22] : memref<8x32xf32, #tpu.memory_space<vmem>>, vector<8x32xf32>
    %c0_23 = arith.constant 0 : index
    %c0_24 = arith.constant 0 : index
    %27 = vector.load %arg9[%c0_23, %c0_24] : memref<8x16xf32, #tpu.memory_space<vmem>>, vector<8x16xf32>
    %28 = arith.truncf %27 : vector<8x16xf32> to vector<8x16xbf16>
    %29 = arith.truncf %1 : vector<16x32xf32> to vector<16x32xbf16>
    %cst_25 = arith.constant dense<0.000000e+00> : vector<8x32xf32>
    %30 = tpu.matmul %28, %29, %cst_25 {dimension_numbers = #tpu.dot_dimension_numbers<[1], [0], [0], [1], [0, 0, 1, 1], [], []>} : vector<8x16xbf16>, vector<16x32xbf16>, vector<8x32xf32> -> vector<8x32xf32>
    %31 = arith.addf %3, %30 : vector<8x32xf32>
    %c0_26 = arith.constant 0 : index
    %c0_27 = arith.constant 0 : index
    %32 = vector.load %arg10[%c0_26, %c0_27] : memref<8x4xf32, #tpu.memory_space<vmem>>, vector<8x4xf32>
    %33 = arith.truncf %32 : vector<8x4xf32> to vector<8x4xbf16>
    %34 = arith.truncf %5 : vector<4x32xf32> to vector<4x32xbf16>
    %cst_28 = arith.constant dense<0.000000e+00> : vector<8x32xf32>
    %35 = tpu.matmul %33, %34, %cst_28 {dimension_numbers = #tpu.dot_dimension_numbers<[1], [0], [0], [1], [0, 0, 1, 1], [], []>} : vector<8x4xbf16>, vector<4x32xbf16>, vector<8x32xf32> -> vector<8x32xf32>
    %36 = arith.addf %31, %35 : vector<8x32xf32>
    %37 = arith.truncf %36 : vector<8x32xf32> to vector<8x32xbf16>
    %38 = arith.truncf %6 : vector<32x32xf32> to vector<32x32xbf16>
    %cst_29 = arith.constant dense<0.000000e+00> : vector<8x32xf32>
    %39 = tpu.matmul %37, %38, %cst_29 {dimension_numbers = #tpu.dot_dimension_numbers<[1], [0], [0], [1], [0, 0, 1, 1], [], []>} : vector<8x32xbf16>, vector<32x32xbf16>, vector<8x32xf32> -> vector<8x32xf32>
    %40 = arith.addf %3, %39 : vector<8x32xf32>
    %41 = arith.addf %40, %26 : vector<8x32xf32>
    %c0_30 = arith.constant 0 : index
    %c0_31 = arith.constant 0 : index
    %c0_32 = arith.constant 0 : index
    %42 = vector.load %arg15[%c0_30, %c0_31, %c0_32] : memref<1x8x32xf32, #tpu.memory_space<vmem>>, vector<1x8x32xf32>
    %43 = vector.shape_cast %42 : vector<1x8x32xf32> to vector<8x32xf32>
    %44 = vector.shape_cast %41 : vector<8x32xf32> to vector<1x8x32xf32>
    tpu.vector_store %arg15[%c0_30, %c0_31, %c0_32], %44 {strides = array<i32>} : memref<1x8x32xf32, #tpu.memory_space<vmem>>, vector<1x8x32xf32>,
    %c0_33 = arith.constant 0 : index
    %c0_34 = arith.constant 0 : index
    %45 = vector.load %arg11[%c0_33, %c0_34] : memref<4x32xf32, #tpu.memory_space<vmem>>, vector<4x32xf32>
    %c0_35 = arith.constant 0 : index
    %c0_36 = arith.constant 0 : index
    %46 = vector.load %arg12[%c0_35, %c0_36] : memref<4x16xf32, #tpu.memory_space<vmem>>, vector<4x16xf32>
    %47 = arith.truncf %46 : vector<4x16xf32> to vector<4x16xbf16>
    %48 = arith.truncf %1 : vector<16x32xf32> to vector<16x32xbf16>
    %cst_37 = arith.constant dense<0.000000e+00> : vector<4x32xf32>
    %49 = tpu.matmul %47, %48, %cst_37 {dimension_numbers = #tpu.dot_dimension_numbers<[1], [0], [0], [1], [0, 0, 1, 1], [], []>} : vector<4x16xbf16>, vector<16x32xbf16>, vector<4x32xf32> -> vector<4x32xf32>
    %50 = arith.addf %5, %49 : vector<4x32xf32>
    %c0_38 = arith.constant 0 : index
    %c0_39 = arith.constant 0 : index
    %51 = vector.load %arg13[%c0_38, %c0_39] : memref<4x8xf32, #tpu.memory_space<vmem>>, vector<4x8xf32>
    %52 = arith.truncf %51 : vector<4x8xf32> to vector<4x8xbf16>
    %53 = arith.truncf %3 : vector<8x32xf32> to vector<8x32xbf16>
    %cst_40 = arith.constant dense<0.000000e+00> : vector<4x32xf32>
    %54 = tpu.matmul %52, %53, %cst_40 {dimension_numbers = #tpu.dot_dimension_numbers<[1], [0], [0], [1], [0, 0, 1, 1], [], []>} : vector<4x8xbf16>, vector<8x32xbf16>, vector<4x32xf32> -> vector<4x32xf32>
    %55 = arith.addf %50, %54 : vector<4x32xf32>
    %56 = arith.truncf %55 : vector<4x32xf32> to vector<4x32xbf16>
    %57 = arith.truncf %6 : vector<32x32xf32> to vector<32x32xbf16>
    %cst_41 = arith.constant dense<0.000000e+00> : vector<4x32xf32>
    %58 = tpu.matmul %56, %57, %cst_41 {dimension_numbers = #tpu.dot_dimension_numbers<[1], [0], [0], [1], [0, 0, 1, 1], [], []>} : vector<4x32xbf16>, vector<32x32xbf16>, vector<4x32xf32> -> vector<4x32xf32>
    %59 = arith.addf %5, %58 : vector<4x32xf32>
    %60 = arith.addf %59, %45 : vector<4x32xf32>
    %c0_42 = arith.constant 0 : index
    %c0_43 = arith.constant 0 : index
    %c0_44 = arith.constant 0 : index
    %61 = vector.load %arg16[%c0_42, %c0_43, %c0_44] : memref<1x4x32xf32, #tpu.memory_space<vmem>>, vector<1x4x32xf32>
    %62 = vector.shape_cast %61 : vector<1x4x32xf32> to vector<4x32xf32>
    %63 = vector.shape_cast %60 : vector<4x32xf32> to vector<1x4x32xf32>
    tpu.vector_store %arg16[%c0_42, %c0_43, %c0_44], %63 {strides = array<i32>} : memref<1x4x32xf32, #tpu.memory_space<vmem>>, vector<1x4x32xf32>,
    return
  }
  func.func @transform_0(%arg0: i32) -> (i32, i32, i32) {
    %c0_i32 = arith.constant 0 : i32
    %c0_i32_0 = arith.constant 0 : i32
    %c0_i32_1 = arith.constant 0 : i32
    return %arg0, %c0_i32, %c0_i32_0 : i32, i32, i32
  }
  func.func @transform_1(%arg0: i32) -> (i32, i32, i32) {
    %c0_i32 = arith.constant 0 : i32
    %c0_i32_0 = arith.constant 0 : i32
    %c0_i32_1 = arith.constant 0 : i32
    return %arg0, %c0_i32, %c0_i32_0 : i32, i32, i32
  }
  func.func @transform_2(%arg0: i32) -> (i32, i32, i32) {
    %c0_i32 = arith.constant 0 : i32
    %c0_i32_0 = arith.constant 0 : i32
    %c0_i32_1 = arith.constant 0 : i32
    return %arg0, %c0_i32, %c0_i32_0 : i32, i32, i32
  }
  func.func @transform_3(%arg0: i32) -> (i32, i32) {
    %c0_i32 = arith.constant 0 : i32
    %c0_i32_0 = arith.constant 0 : i32
    %c0_i32_1 = arith.constant 0 : i32
    return %c0_i32, %c0_i32_0 : i32, i32
  }
  func.func @transform_4(%arg0: i32) -> (i32, i32) {
    %c0_i32 = arith.constant 0 : i32
    %c0_i32_0 = arith.constant 0 : i32
    %c0_i32_1 = arith.constant 0 : i32
    return %c0_i32, %c0_i32_0 : i32, i32
  }
  func.func @transform_5(%arg0: i32) -> (i32, i32) {
    %c0_i32 = arith.constant 0 : i32
    %c0_i32_0 = arith.constant 0 : i32
    %c0_i32_1 = arith.constant 0 : i32
    return %c0_i32, %c0_i32_0 : i32, i32
  }
  func.func @transform_6(%arg0: i32) -> (i32, i32) {
    %c0_i32 = arith.constant 0 : i32
    %c0_i32_0 = arith.constant 0 : i32
    %c0_i32_1 = arith.constant 0 : i32
    return %c0_i32, %c0_i32_0 : i32, i32
  }
  func.func @transform_7(%arg0: i32) -> (i32, i32) {
    %c0_i32 = arith.constant 0 : i32
    %c0_i32_0 = arith.constant 0 : i32
    %c0_i32_1 = arith.constant 0 : i32
    return %c0_i32, %c0_i32_0 : i32, i32
  }
  func.func @transform_8(%arg0: i32) -> (i32, i32) {
    %c0_i32 = arith.constant 0 : i32
    %c0_i32_0 = arith.constant 0 : i32
    %c0_i32_1 = arith.constant 0 : i32
    return %c0_i32, %c0_i32_0 : i32, i32
  }
  func.func @transform_9(%arg0: i32) -> (i32, i32) {
    %c0_i32 = arith.constant 0 : i32
    %c0_i32_0 = arith.constant 0 : i32
    %c0_i32_1 = arith.constant 0 : i32
    return %c0_i32, %c0_i32_0 : i32, i32
  }
  func.func @transform_10(%arg0: i32) -> (i32, i32) {
    %c0_i32 = arith.constant 0 : i32
    %c0_i32_0 = arith.constant 0 : i32
    %c0_i32_1 = arith.constant 0 : i32
    return %c0_i32, %c0_i32_0 : i32, i32
  }
  func.func @transform_11(%arg0: i32) -> (i32, i32) {
    %c0_i32 = arith.constant 0 : i32
    %c0_i32_0 = arith.constant 0 : i32
    %c0_i32_1 = arith.constant 0 : i32
    return %c0_i32, %c0_i32_0 : i32, i32
  }
  func.func @transform_12(%arg0: i32) -> (i32, i32) {
    %c0_i32 = arith.constant 0 : i32
    %c0_i32_0 = arith.constant 0 : i32
    %c0_i32_1 = arith.constant 0 : i32
    return %c0_i32, %c0_i32_0 : i32, i32
  }
  func.func @transform_13(%arg0: i32) -> (i32, i32, i32) {
    %c0_i32 = arith.constant 0 : i32
    %c0_i32_0 = arith.constant 0 : i32
    %c0_i32_1 = arith.constant 0 : i32
    return %arg0, %c0_i32, %c0_i32_0 : i32, i32, i32
  }
  func.func @transform_14(%arg0: i32) -> (i32, i32, i32) {
    %c0_i32 = arith.constant 0 : i32
    %c0_i32_0 = arith.constant 0 : i32
    %c0_i32_1 = arith.constant 0 : i32
    return %arg0, %c0_i32, %c0_i32_0 : i32, i32, i32
  }
  func.func @transform_15(%arg0: i32) -> (i32, i32, i32) {
    %c0_i32 = arith.constant 0 : i32
    %c0_i32_0 = arith.constant 0 : i32
    %c0_i32_1 = arith.constant 0 : i32
    return %arg0, %c0_i32, %c0_i32_0 : i32, i32, i32
  }
}

module attributes {stable_mosaic.version = 11 : i64} {
  func.func @kernel(%arg0: i32, %arg1: memref<1x16x32xf32, #tpu.memory_space<vmem>>, %arg2: memref<1x8x32xf32, #tpu.memory_space<vmem>>, %arg3: memref<1x4x32xf32, #tpu.memory_space<vmem>>, %arg4: memref<8x16xf32, #tpu.memory_space<vmem>>, %arg5: memref<8x8xf32, #tpu.memory_space<vmem>>, %arg6: memref<8x4xf32, #tpu.memory_space<vmem>>, %arg7: memref<32x4xf32, #tpu.memory_space<vmem>>, %arg8: memref<8x4xf32, #tpu.memory_space<vmem>>, %arg9: memref<1x8x4xf32, #tpu.memory_space<vmem>>) attributes {dimension_semantics = [#tpu.dimension_semantics<parallel>], iteration_bounds = array<i64: 2>, scalar_prefetch = 0 : i64, scratch_operands = 0 : i64, tpu.core_type = #tpu.core_type<tc>, window_params = [{transform_indices = @transform_0, window_bounds = array<i64: 1, 16, 32>}, {transform_indices = @transform_1, window_bounds = array<i64: 1, 8, 32>}, {transform_indices = @transform_2, window_bounds = array<i64: 1, 4, 32>}, {pipeline_mode = #tpu.pipeline_mode<synchronous>, transform_indices = @transform_3, window_bounds = array<i64: 8, 16>}, {pipeline_mode = #tpu.pipeline_mode<synchronous>, transform_indices = @transform_4, window_bounds = array<i64: 8, 8>}, {pipeline_mode = #tpu.pipeline_mode<synchronous>, transform_indices = @transform_5, window_bounds = array<i64: 8, 4>}, {pipeline_mode = #tpu.pipeline_mode<synchronous>, transform_indices = @transform_6, window_bounds = array<i64: 32, 4>}, {pipeline_mode = #tpu.pipeline_mode<synchronous>, transform_indices = @transform_7, window_bounds = array<i64: 8, 4>}, {transform_indices = @transform_8, window_bounds = array<i64: 1, 8, 4>}]} {
    %c0 = arith.constant 0 : index
    %c0_0 = arith.constant 0 : index
    %0 = vector.load %arg4[%c0, %c0_0] : memref<8x16xf32, #tpu.memory_space<vmem>>, vector<8x16xf32>
    %c0_1 = arith.constant 0 : index
    %c0_2 = arith.constant 0 : index
    %c0_3 = arith.constant 0 : index
    %1 = vector.load %arg1[%c0_1, %c0_2, %c0_3] : memref<1x16x32xf32, #tpu.memory_space<vmem>>, vector<1x16x32xf32>
    %2 = vector.shape_cast %1 : vector<1x16x32xf32> to vector<16x32xf32>
    %3 = arith.truncf %0 : vector<8x16xf32> to vector<8x16xbf16>
    %4 = arith.truncf %2 : vector<16x32xf32> to vector<16x32xbf16>
    %cst = arith.constant dense<0.000000e+00> : vector<8x32xf32>
    %5 = tpu.matmul %3, %4, %cst {dimension_numbers = #tpu.dot_dimension_numbers<[1], [0], [0], [1], [0, 0, 1, 1], [], []>} : vector<8x16xbf16>, vector<16x32xbf16>, vector<8x32xf32> -> vector<8x32xf32>
    %c0_4 = arith.constant 0 : index
    %c0_5 = arith.constant 0 : index
    %6 = vector.load %arg5[%c0_4, %c0_5] : memref<8x8xf32, #tpu.memory_space<vmem>>, vector<8x8xf32>
    %c0_6 = arith.constant 0 : index
    %c0_7 = arith.constant 0 : index
    %c0_8 = arith.constant 0 : index
    %7 = vector.load %arg2[%c0_6, %c0_7, %c0_8] : memref<1x8x32xf32, #tpu.memory_space<vmem>>, vector<1x8x32xf32>
    %8 = vector.shape_cast %7 : vector<1x8x32xf32> to vector<8x32xf32>
    %9 = arith.truncf %6 : vector<8x8xf32> to vector<8x8xbf16>
    %10 = arith.truncf %8 : vector<8x32xf32> to vector<8x32xbf16>
    %cst_9 = arith.constant dense<0.000000e+00> : vector<8x32xf32>
    %11 = tpu.matmul %9, %10, %cst_9 {dimension_numbers = #tpu.dot_dimension_numbers<[1], [0], [0], [1], [0, 0, 1, 1], [], []>} : vector<8x8xbf16>, vector<8x32xbf16>, vector<8x32xf32> -> vector<8x32xf32>
    %12 = arith.addf %5, %11 : vector<8x32xf32>
    %c0_10 = arith.constant 0 : index
    %c0_11 = arith.constant 0 : index
    %13 = vector.load %arg6[%c0_10, %c0_11] : memref<8x4xf32, #tpu.memory_space<vmem>>, vector<8x4xf32>
    %c0_12 = arith.constant 0 : index
    %c0_13 = arith.constant 0 : index
    %c0_14 = arith.constant 0 : index
    %14 = vector.load %arg3[%c0_12, %c0_13, %c0_14] : memref<1x4x32xf32, #tpu.memory_space<vmem>>, vector<1x4x32xf32>
    %15 = vector.shape_cast %14 : vector<1x4x32xf32> to vector<4x32xf32>
    %16 = arith.truncf %13 : vector<8x4xf32> to vector<8x4xbf16>
    %17 = arith.truncf %15 : vector<4x32xf32> to vector<4x32xbf16>
    %cst_15 = arith.constant dense<0.000000e+00> : vector<8x32xf32>
    %18 = tpu.matmul %16, %17, %cst_15 {dimension_numbers = #tpu.dot_dimension_numbers<[1], [0], [0], [1], [0, 0, 1, 1], [], []>} : vector<8x4xbf16>, vector<4x32xbf16>, vector<8x32xf32> -> vector<8x32xf32>
    %19 = arith.addf %12, %18 : vector<8x32xf32>
    %c0_16 = arith.constant 0 : index
    %c0_17 = arith.constant 0 : index
    %20 = vector.load %arg7[%c0_16, %c0_17] : memref<32x4xf32, #tpu.memory_space<vmem>>, vector<32x4xf32>
    %21 = arith.truncf %19 : vector<8x32xf32> to vector<8x32xbf16>
    %22 = arith.truncf %20 : vector<32x4xf32> to vector<32x4xbf16>
    %cst_18 = arith.constant dense<0.000000e+00> : vector<8x4xf32>
    %23 = tpu.matmul %21, %22, %cst_18 {dimension_numbers = #tpu.dot_dimension_numbers<[1], [0], [0], [1], [0, 0, 1, 1], [], []>} : vector<8x32xbf16>, vector<32x4xbf16>, vector<8x4xf32> -> vector<8x4xf32>
    %c0_19 = arith.constant 0 : index
    %c0_20 = arith.constant 0 : index
    %24 = vector.load %arg8[%c0_19, %c0_20] : memref<8x4xf32, #tpu.memory_space<vmem>>, vector<8x4xf32>
    %25 = arith.addf %23, %24 : vector<8x4xf32>
    %c0_21 = arith.constant 0 : index
    %c0_22 = arith.constant 0 : index
    %c0_23 = arith.constant 0 : index
    %26 = vector.load %arg9[%c0_21, %c0_22, %c0_23] : memref<1x8x4xf32, #tpu.memory_space<vmem>>, vector<1x8x4xf32>
    %27 = vector.shape_cast %26 : vector<1x8x4xf32> to vector<8x4xf32>
    %28 = vector.shape_cast %25 : vector<8x4xf32> to vector<1x8x4xf32>
    tpu.vector_store %arg9[%c0_21, %c0_22, %c0_23], %28 {strides = array<i32>} : memref<1x8x4xf32, #tpu.memory_space<vmem>>, vector<1x8x4xf32>,
    return
  }
  func.func @transform_0(%arg0: i32) -> (i32, i32, i32) {
    %c0_i32 = arith.constant 0 : i32
    %c0_i32_0 = arith.constant 0 : i32
    %c0_i32_1 = arith.constant 0 : i32
    return %arg0, %c0_i32, %c0_i32_0 : i32, i32, i32
  }
  func.func @transform_1(%arg0: i32) -> (i32, i32, i32) {
    %c0_i32 = arith.constant 0 : i32
    %c0_i32_0 = arith.constant 0 : i32
    %c0_i32_1 = arith.constant 0 : i32
    return %arg0, %c0_i32, %c0_i32_0 : i32, i32, i32
  }
  func.func @transform_2(%arg0: i32) -> (i32, i32, i32) {
    %c0_i32 = arith.constant 0 : i32
    %c0_i32_0 = arith.constant 0 : i32
    %c0_i32_1 = arith.constant 0 : i32
    return %arg0, %c0_i32, %c0_i32_0 : i32, i32, i32
  }
  func.func @transform_3(%arg0: i32) -> (i32, i32) {
    %c0_i32 = arith.constant 0 : i32
    %c0_i32_0 = arith.constant 0 : i32
    %c0_i32_1 = arith.constant 0 : i32
    return %c0_i32, %c0_i32_0 : i32, i32
  }
  func.func @transform_4(%arg0: i32) -> (i32, i32) {
    %c0_i32 = arith.constant 0 : i32
    %c0_i32_0 = arith.constant 0 : i32
    %c0_i32_1 = arith.constant 0 : i32
    return %c0_i32, %c0_i32_0 : i32, i32
  }
  func.func @transform_5(%arg0: i32) -> (i32, i32) {
    %c0_i32 = arith.constant 0 : i32
    %c0_i32_0 = arith.constant 0 : i32
    %c0_i32_1 = arith.constant 0 : i32
    return %c0_i32, %c0_i32_0 : i32, i32
  }
  func.func @transform_6(%arg0: i32) -> (i32, i32) {
    %c0_i32 = arith.constant 0 : i32
    %c0_i32_0 = arith.constant 0 : i32
    %c0_i32_1 = arith.constant 0 : i32
    return %c0_i32, %c0_i32_0 : i32, i32
  }
  func.func @transform_7(%arg0: i32) -> (i32, i32) {
    %c0_i32 = arith.constant 0 : i32
    %c0_i32_0 = arith.constant 0 : i32
    %c0_i32_1 = arith.constant 0 : i32
    return %c0_i32, %c0_i32_0 : i32, i32
  }
  func.func @transform_8(%arg0: i32) -> (i32, i32, i32) {
    %c0_i32 = arith.constant 0 : i32
    %c0_i32_0 = arith.constant 0 : i32
    %c0_i32_1 = arith.constant 0 : i32
    return %arg0, %c0_i32, %c0_i32_0 : i32, i32, i32
  }
}

</mosaic_0001>

<llo_original>
// kernel: timemixer_forward.4
$region0: #{timemixer_forward.4}
  #allocation0 [shape = 'u32[]', space=smem, size = 0x4, offset = 0x4, fixed_abs, tag = 'smem constant byte address 0x4 - core index']
  #allocation1 [shape = 'u32[144,128]{1,0:T(1,128)}', space=vmem, size = 0x12000, scoped, tag = 'internal scratch']
  %s0 = inlined_call_operand.vmem [shape: f32[2,16,4], index: 0, kind: input, shape index: {}]
  %s1 = inlined_call_operand.vmem [shape: f32[4,32], index: 1, kind: input, shape index: {}]
  %s2 = inlined_call_operand.vmem [shape: f32[1,32], index: 2, kind: input, shape index: {}]
  %s3 = inlined_call_operand.vmem [shape: f32[8,16], index: 3, kind: input, shape index: {}]
  %s4 = inlined_call_operand.vmem [shape: f32[4,16], index: 4, kind: input, shape index: {}]
  %s5 = inlined_call_operand.vmem [shape: f32[2,16,32], index: 5, kind: output, shape index: {0}]
  %s6 = inlined_call_operand.vmem [shape: f32[2,8,32], index: 6, kind: output, shape index: {1}]
  %s7 = inlined_call_operand.vmem [shape: f32[2,4,32], index: 7, kind: output, shape index: {2}]
  %8 = xla_tuple %s5, %s6, %s7
  %s9 = sld [smem:[#allocation0]]
  $region69: #{timemixer_forward.4} parent=0
    _
  %s11 = ssub.s32 1, %s9
  %s12 = scalar_select 0, %s11, %s9
  loop: start=0, step=1, limit=4
  $region2: #{timemixer_forward.4} parent=0 // loop_pre_header
    _
  $region3: #{timemixer_forward.4} parent=0 // loop_header
    %s14 = sphi 0, %s18
    %p15 = scmp.ge.s32.totalorder %s14, 4
    %s24 = sphi 0, %s26
    %s27 = sphi 0, %s24
    %s28 = sphi 0, %s27
    %s44 = sphi 0, %s28
    %s48 = sphi 0, %s48
    %s50 = sphi 0, %s48
    %s51 = sphi 0, %s50
    %s65 = sphi 0, %s51
    %s69 = sphi 0, %s69
    %s71 = sphi 0, %s69
    %s72 = sphi 0, %s71
    %s86 = sphi 0, %s72
    %s90 = sphi 0, %s90
    %s92 = sphi 0, %s90
    %s93 = sphi 0, %s92
    %s107 = sphi 0, %s93
    %s111 = sphi 0, %s111
    %s113 = sphi 0, %s111
    %s114 = sphi 0, %s113
    %s128 = sphi 0, %s114
    %s134 = sphi 0, %s136
    %s137 = sphi 0, %s134
    %s138 = sphi 0, %s137
    %s154 = sphi 0, %s138
    %s160 = sphi 0, %s162
    %s163 = sphi 0, %s160
    %s164 = sphi 0, %s163
    %s180 = sphi 0, %s164
    %s186 = sphi 0, %s188
    %s189 = sphi 0, %s186
    %s190 = sphi 0, %s189
    %s206 = sphi 0, %s190
  $region4: #{timemixer_forward.4} parent=0 // loop_header_branch
    %17 = sbr.rel (%p15) target = $region8
  $region5: #{timemixer_forward.4} parent=0 // loop_body
    %s19 = ssub.s32 %s14, 1
    %s20 = ssub.s32 %s14, 2
    %s21 = sadd.s32 %s14, 1
    %s22 = ssub.s32 %s14, %s21
    %p23 = scmp.eq.s32.totalorder %s22, 0
    %s25 = sadd.s32 %s24, 1
    %s26 = scalar_select %p23, %s24, %s25
    %p29 = pneg %p23
    %p30 = scmp.eq.s32.totalorder %s14, 1
    %p31 = por %p29, %p30
    %p32 = scmp.ne.s32.totalorder %s24, %s27
    %p33 = scmp.eq.s32.totalorder %s14, 0
    %p34 = por %p32, %p33
    %p35 = scmp.ne.s32.totalorder %s24, %s27
    %p36 = scmp.eq.s32.totalorder %s19, 1
    %p37 = por %p35, %p36
    %p38 = scmp.ne.s32.totalorder %s27, %s28
    %p39 = scmp.eq.s32.totalorder %s19, 0
    %p40 = por %p38, %p39
    %p41 = scmp.ne.s32.totalorder %s27, %s28
    %p42 = scmp.eq.s32.totalorder %s20, 1
    %p43 = por %p41, %p42
    %p45 = scmp.ne.s32.totalorder %s28, %s44
    %p46 = scmp.eq.s32.totalorder %s20, 0
    %p47 = por %p45, %p46
    %s49 = sadd.s32 %s48, 1
    %p52 = scmp.eq.s32.totalorder %s14, 1
    %p53 = scmp.ne.s32.totalorder %s48, %s50
    %p54 = scmp.eq.s32.totalorder %s14, 0
    %p55 = por %p53, %p54
    %p56 = scmp.ne.s32.totalorder %s48, %s50
    %p57 = scmp.eq.s32.totalorder %s19, 1
    %p58 = por %p56, %p57
    %p59 = scmp.ne.s32.totalorder %s50, %s51
    %p60 = scmp.eq.s32.totalorder %s19, 0
    %p61 = por %p59, %p60
    %p62 = scmp.ne.s32.totalorder %s50, %s51
    %p63 = scmp.eq.s32.totalorder %s20, 1
    %p64 = por %p62, %p63
    %p66 = scmp.ne.s32.totalorder %s51, %s65
    %p67 = scmp.eq.s32.totalorder %s20, 0
    %p68 = por %p66, %p67
    %s70 = sadd.s32 %s69, 1
    %p73 = scmp.eq.s32.totalorder %s14, 1
    %p74 = scmp.ne.s32.totalorder %s69, %s71
    %p75 = scmp.eq.s32.totalorder %s14, 0
    %p76 = por %p74, %p75
    %p77 = scmp.ne.s32.totalorder %s69, %s71
    %p78 = scmp.eq.s32.totalorder %s19, 1
    %p79 = por %p77, %p78
    %p80 = scmp.ne.s32.totalorder %s71, %s72
    %p81 = scmp.eq.s32.totalorder %s19, 0
    %p82 = por %p80, %p81
    %p83 = scmp.ne.s32.totalorder %s71, %s72
    %p84 = scmp.eq.s32.totalorder %s20, 1
    %p85 = por %p83, %p84
    %p87 = scmp.ne.s32.totalorder %s72, %s86
    %p88 = scmp.eq.s32.totalorder %s20, 0
    %p89 = por %p87, %p88
    %s91 = sadd.s32 %s90, 1
    %p94 = scmp.eq.s32.totalorder %s14, 1
    %p95 = scmp.ne.s32.totalorder %s90, %s92
    %p96 = scmp.eq.s32.totalorder %s14, 0
    %p97 = por %p95, %p96
    %p98 = scmp.ne.s32.totalorder %s90, %s92
    %p99 = scmp.eq.s32.totalorder %s19, 1
    %p100 = por %p98, %p99
    %p101 = scmp.ne.s32.totalorder %s92, %s93
    %p102 = scmp.eq.s32.totalorder %s19, 0
    %p103 = por %p101, %p102
    %p104 = scmp.ne.s32.totalorder %s92, %s93
    %p105 = scmp.eq.s32.totalorder %s20, 1
    %p106 = por %p104, %p105
    %p108 = scmp.ne.s32.totalorder %s93, %s107
    %p109 = scmp.eq.s32.totalorder %s20, 0
    %p110 = por %p108, %p109
    %s112 = sadd.s32 %s111, 1
    %p115 = scmp.eq.s32.totalorder %s14, 1
    %p116 = scmp.ne.s32.totalorder %s111, %s113
    %p117 = scmp.eq.s32.totalorder %s14, 0
    %p118 = por %p116, %p117
    %p119 = scmp.ne.s32.totalorder %s111, %s113
    %p120 = scmp.eq.s32.totalorder %s19, 1
    %p121 = por %p119, %p120
    %p122 = scmp.ne.s32.totalorder %s113, %s114
    %p123 = scmp.eq.s32.totalorder %s19, 0
    %p124 = por %p122, %p123
    %p125 = scmp.ne.s32.totalorder %s113, %s114
    %p126 = scmp.eq.s32.totalorder %s20, 1
    %p127 = por %p125, %p126
    %p129 = scmp.ne.s32.totalorder %s114, %s128
    %p130 = scmp.eq.s32.totalorder %s20, 0
    %p131 = por %p129, %p130
    %s132 = ssub.s32 %s14, %s21
    %p133 = scmp.eq.s32.totalorder %s132, 0
    %s135 = sadd.s32 %s134, 1
    %s136 = scalar_select %p133, %s134, %s135
    %p139 = pneg %p133
    %p140 = scmp.eq.s32.totalorder %s14, 1
    %p141 = por %p139, %p140
    %p142 = scmp.ne.s32.totalorder %s134, %s137
    %p143 = scmp.eq.s32.totalorder %s14, 0
    %p144 = por %p142, %p143
    %p145 = scmp.ne.s32.totalorder %s134, %s137
    %p146 = scmp.eq.s32.totalorder %s19, 1
    %p147 = por %p145, %p146
    %p148 = scmp.ne.s32.totalorder %s137, %s138
    %p149 = scmp.eq.s32.totalorder %s19, 0
    %p150 = por %p148, %p149
    %p151 = scmp.ne.s32.totalorder %s137, %s138
    %p152 = scmp.eq.s32.totalorder %s20, 1
    %p153 = por %p151, %p152
    %p155 = scmp.ne.s32.totalorder %s138, %s154
    %p156 = scmp.eq.s32.totalorder %s20, 0
    %p157 = por %p155, %p156
    %s158 = ssub.s32 %s14, %s21
    %p159 = scmp.eq.s32.totalorder %s158, 0
    %s161 = sadd.s32 %s160, 1
    %s162 = scalar_select %p159, %s160, %s161
    %p165 = pneg %p159
    %p166 = scmp.eq.s32.totalorder %s14, 1
    %p167 = por %p165, %p166
    %p168 = scmp.ne.s32.totalorder %s160, %s163
    %p169 = scmp.eq.s32.totalorder %s14, 0
    %p170 = por %p168, %p169
    %p171 = scmp.ne.s32.totalorder %s160, %s163
    %p172 = scmp.eq.s32.totalorder %s19, 1
    %p173 = por %p171, %p172
    %p174 = scmp.ne.s32.totalorder %s163, %s164
    %p175 = scmp.eq.s32.totalorder %s19, 0
    %p176 = por %p174, %p175
    %p177 = scmp.ne.s32.totalorder %s163, %s164
    %p178 = scmp.eq.s32.totalorder %s20, 1
    %p179 = por %p177, %p178
    %p181 = scmp.ne.s32.totalorder %s164, %s180
    %p182 = scmp.eq.s32.totalorder %s20, 0
    %p183 = por %p181, %p182
    %s184 = ssub.s32 %s14, %s21
    %p185 = scmp.eq.s32.totalorder %s184, 0
    %s187 = sadd.s32 %s186, 1
    %s188 = scalar_select %p185, %s186, %s187
    %p191 = pneg %p185
    %p192 = scmp.eq.s32.totalorder %s14, 1
    %p193 = por %p191, %p192
    %p194 = scmp.ne.s32.totalorder %s186, %s189
    %p195 = scmp.eq.s32.totalorder %s14, 0
    %p196 = por %p194, %p195
    %p197 = scmp.ne.s32.totalorder %s186, %s189
    %p198 = scmp.eq.s32.totalorder %s19, 1
    %p199 = por %p197, %p198
    %p200 = scmp.ne.s32.totalorder %s189, %s190
    %p201 = scmp.eq.s32.totalorder %s19, 0
    %p202 = por %p200, %p201
    %p203 = scmp.ne.s32.totalorder %s189, %s190
    %p204 = scmp.eq.s32.totalorder %s20, 1
    %p205 = por %p203, %p204
    %p207 = scmp.ne.s32.totalorder %s190, %s206
    %p208 = scmp.eq.s32.totalorder %s20, 0
    %p209 = por %p207, %p208
    %p210 = scmp.le.s32.totalorder 1, %s14
    %p211 = scmp.lt.s32.totalorder %s14, 3
    %p212 = pnand %p210, %p211
    %p213 = pneg %p212
    // Predicated region
    $region9: #{timemixer_forward.4} parent=5 // pred_check
      _
    $region10: #{timemixer_forward.4} parent=5 // pred_check_branch
      %215 = sbr.rel (%p212) target = $region12
    $region11: #{timemixer_forward.4} parent=5 // pred_region
      %s216 = ssub.s32 %s14, 1
      // Predicated region
      $region13: #{timemixer_forward.4} parent=11 // pred_check
        %p217 = pneg %p61
      $region14: #{timemixer_forward.4} parent=11 // pred_check_branch
        %219 = sbr.rel (%p217) target = $region16
      $region15: #{timemixer_forward.4} parent=11 // pred_region
        _
      $region16: #{timemixer_forward.4} parent=11 // pred_fallthru
        _
      // Predicated region
      $region17: #{timemixer_forward.4} parent=11 // pred_check
        %p220 = pneg %p82
      $region18: #{timemixer_forward.4} parent=11 // pred_check_branch
        %222 = sbr.rel (%p220) target = $region20
      $region19: #{timemixer_forward.4} parent=11 // pred_region
        _
      $region20: #{timemixer_forward.4} parent=11 // pred_fallthru
        _
      // Predicated region
      $region21: #{timemixer_forward.4} parent=11 // pred_check
        %p223 = pneg %p103
      $region22: #{timemixer_forward.4} parent=11 // pred_check_branch
        %225 = sbr.rel (%p223) target = $region24
      $region23: #{timemixer_forward.4} parent=11 // pred_region
        _
      $region24: #{timemixer_forward.4} parent=11 // pred_fallthru
        _
      // Predicated region
      $region25: #{timemixer_forward.4} parent=11 // pred_check
        %p226 = pneg %p124
      $region26: #{timemixer_forward.4} parent=11 // pred_check_branch
        %228 = sbr.rel (%p226) target = $region28
      $region27: #{timemixer_forward.4} parent=11 // pred_region
        _
      $region28: #{timemixer_forward.4} parent=11 // pred_fallthru
        _
    $region12: #{timemixer_forward.4} parent=5 // pred_fallthru
      _
    %p229 = scmp.lt.s32.totalorder %s14, 2
    // Predicated region
    $region29: #{timemixer_forward.4} parent=5 // pred_check
      %p230 = pneg %p229
    $region30: #{timemixer_forward.4} parent=5 // pred_check_branch
      %232 = sbr.rel (%p230) target = $region32
    $region31: #{timemixer_forward.4} parent=5 // pred_region
      // Predicated region
      $region33: #{timemixer_forward.4} parent=31 // pred_check
        %p233 = pneg %p34
      $region34: #{timemixer_forward.4} parent=31 // pred_check_branch
        %235 = sbr.rel (%p233) target = $region36
      $region35: #{timemixer_forward.4} parent=31 // pred_region
        %p236 = scmp.lt.s32.totalorder %s14, 1
        %s237 = scalar_select %p236, %s14, 1
        %s238 = smul.addr %s237, 2
        %s239 = smul.addr %s238, 8
        %s240 = scalar_lea.vmem %s0, %s239
      $region36: #{timemixer_forward.4} parent=31 // pred_fallthru
        _
    $region32: #{timemixer_forward.4} parent=5 // pred_fallthru
      _
    %p241 = scmp.le.s32.totalorder 1, %s14
    %p242 = scmp.lt.s32.totalorder %s14, 3
    %p243 = pnand %p241, %p242
    %p244 = pneg %p243
    // Predicated region
    $region37: #{timemixer_forward.4} parent=5 // pred_check
      _
    $region38: #{timemixer_forward.4} parent=5 // pred_check_branch
      %246 = sbr.rel (%p243) target = $region40
    $region39: #{timemixer_forward.4} parent=5 // pred_region
      %s247 = ssub.s32 %s14, 1
      %p248 = scmp.lt.s32.totalorder %s19, 1
      %s249 = scalar_select %p248, %s19, 1
      %s250 = smul.addr %s249, 2
      %s251 = smul.addr %s250, 8
      %s252 = scalar_lea.vmem %s0, %s251
      %p253 = pneg %p40
      %p254 = pneg %p37
      %p255 = pneg %p61
      %p256 = pneg %p58
      %p257 = pneg %p82
      %p258 = pneg %p79
      %p259 = pneg %p103
      %p260 = pneg %p100
      %p261 = pneg %p124
      %p262 = pneg %p121
      %p263 = pneg %p150
      %p264 = pneg %p147
      %p265 = scmp.lt.s32.totalorder %s19, 1
      %s266 = scalar_select %p265, %s19, 1
      %s267 = smul.addr %s266, 2
      %s268 = smul.addr %s267, 8
      %s269 = scalar_lea.vmem %s5, %s268
      %p270 = pneg %p176
      %p271 = pneg %p173
      %p272 = scmp.lt.s32.totalorder %s19, 1
      %s273 = scalar_select %p272, %s19, 1
      %s274 = smul.addr %s273, 8
      %s275 = scalar_lea.vmem %s6, %s274
      %p276 = pneg %p202
      %p277 = pneg %p199
      %p278 = scmp.lt.s32.totalorder %s19, 1
      %s279 = scalar_select %p278, %s19, 1
      %s280 = smul.addr %s279, 4
      %s281 = scalar_lea.vmem %s7, %s280
      %p282 = scmp.lt.s32.totalorder %s19, 1
      %s283 = scalar_select %p282, %s19, 1
      %s284 = smul.addr %s283, 2
      %s285 = smul.addr %s284, 8
      %s286 = scalar_lea.vmem %s0, %s285
      %p287 = scmp.lt.s32.totalorder %s19, 1
      %s288 = scalar_select %p287, %s19, 1
      %s289 = smul.addr %s288, 2
      %s290 = smul.addr %s289, 8
      %s291 = scalar_lea.vmem %s5, %s290
      %p292 = scmp.lt.s32.totalorder %s19, 1
      %s293 = scalar_select %p292, %s19, 1
      %s294 = smul.addr %s293, 8
      %s295 = scalar_lea.vmem %s6, %s294
      %p296 = scmp.lt.s32.totalorder %s19, 1
      %s297 = scalar_select %p296, %s19, 1
      %s298 = smul.addr %s297, 4
      %s299 = scalar_lea.vmem %s7, %s298
      %v301 = vld [vmem:[%s286] sm:$0xff]
      %v302 = vld [vmem:[%s286 + $0x8] sm:$0xff]
      %v303 = vld [vmem:[%s1] sm:$0xf]
      %v304 = vpack.c.bf16 %v302, %v301
      %v305 = vpack.c.bf16 %v303, %v303
      %v306 = vld [vmem:[%s2] sm:$0x1]
      %v308 = vlaneseq
      %v309 = vshrl.u32 %v308, 7
      %v310 = vsub.s32 0, %v309
      %v311 = vrot.slane %v306, %v310
      %vm313 = vcmask 31744
      %v315 = vsel %vm313, %v304, 0
      %vm317 = vcmask 1041408
      %v319 = vsel %vm317, %v305, 0
      %321 = vmatprep.subr.bf16.mxu0 0
      %322 = vmatpush1.bf16.msra.mxu0 %v319
      %323 = vmatprep.subr.bf16.mxu0 0
      %324 = vmatpush1.bf16.msra.mxu0 0
      %325 = vmatprep.subr.bf16.mxu0 0
      %326 = vmatpush1.bf16.msra.mxu0 0
      %327 = vmatprep.subr.bf16.mxu0 0
      %328 = vmatpush1.bf16.msra.mxu0 0
      %329 = vmatprep.subr.bf16.mxu0 0
      %330 = vmatpush1.bf16.msra.mxu0 0
      %331 = vmatprep.subr.bf16.mxu0 0
      %332 = vmatpush1.bf16.msra.mxu0 0
      %333 = vmatprep.subr.bf16.mxu0 0
      %334 = vmatpush1.bf16.msra.mxu0 0
      %335 = vmatprep.subr.bf16.mxu0 0
      %336 = vmatpush1.bf16.msra.mxu0 0
      %337 = vmatprep.subr.bf16.mxu0 0
      %338 = vmatpush1.bf16.msra.mxu0 0
      %339 = vmatprep.subr.bf16.mxu0 0
      %340 = vmatpush1.bf16.msra.mxu0 0
      %341 = vmatprep.subr.bf16.mxu0 0
      %342 = vmatpush1.bf16.msra.mxu0 0
      %343 = vmatprep.subr.bf16.mxu0 0
      %344 = vmatpush1.bf16.msra.mxu0 0
      %345 = vmatprep.subr.bf16.mxu0 0
      %346 = vmatpush1.bf16.msra.mxu0 0
      %347 = vmatprep.subr.bf16.mxu0 0
      %348 = vmatpush1.bf16.msra.mxu0 0
      %349 = vmatprep.subr.bf16.mxu0 0
      %350 = vmatpush1.bf16.msra.mxu0 0
      %351 = vmatprep.subr.bf16.mxu0 0
      %352 = vmatpush1.bf16.msra.mxu0 0
      %353 = vmatprep.mubr.bf16.mxu0 0
      %354 = vmatmul.mubr.bf16.gmra.mrb[0].mxu0 %v315
      %v355 = vpop.f32.mrb[0].mxu0
      %v356 = vadd.f32 %v311, %v355
      %v357 = vpop.f32.mrb[0].mxu0
      %v358 = vpop.f32.mrb[0].mxu0
      %v359 = vadd.f32 %v311, %v358
      %v360 = vpop.f32.mrb[0].mxu0
      %361 = vdwg.mxu0
      %vm362 = vcmask 261120
      %363 = vst.msk [vmem:[%s291] sm:$0xff] %vm362, %v356
      %364 = vst.msk [vmem:[%s291 + $0x8] sm:$0xff] %vm362, %v359
      %v365 = vld [vmem:[%s3] sm:$0xff]
      %v366 = vpack.c.bf16 %v365, %v365
      %v367 = vpack.c.bf16 %v359, %v356
      %vm368 = vcmask 130048
      %v370 = vsel %vm368, %v366, 0
      %372 = vmatprep.subr.bf16.mxu0 0
      %373 = vmatpush1.bf16.msra.mxu0 %v367
      %374 = vmatprep.subr.bf16.mxu0 0
      %375 = vmatpush1.bf16.msra.mxu0 0
      %376 = vmatprep.subr.bf16.mxu0 0
      %377 = vmatpush1.bf16.msra.mxu0 0
      %378 = vmatprep.subr.bf16.mxu0 0
      %379 = vmatpush1.bf16.msra.mxu0 0
      %380 = vmatprep.subr.bf16.mxu0 0
      %381 = vmatpush1.bf16.msra.mxu0 0
      %382 = vmatprep.subr.bf16.mxu0 0
      %383 = vmatpush1.bf16.msra.mxu0 0
      %384 = vmatprep.subr.bf16.mxu0 0
      %385 = vmatpush1.bf16.msra.mxu0 0
      %386 = vmatprep.subr.bf16.mxu0 0
      %387 = vmatpush1.bf16.msra.mxu0 0
      %388 = vmatprep.subr.bf16.mxu0 0
      %389 = vmatpush1.bf16.msra.mxu0 0
      %390 = vmatprep.subr.bf16.mxu0 0
      %391 = vmatpush1.bf16.msra.mxu0 0
      %392 = vmatprep.subr.bf16.mxu0 0
      %393 = vmatpush1.bf16.msra.mxu0 0
      %394 = vmatprep.subr.bf16.mxu0 0
      %395 = vmatpush1.bf16.msra.mxu0 0
      %396 = vmatprep.subr.bf16.mxu0 0
      %397 = vmatpush1.bf16.msra.mxu0 0
      %398 = vmatprep.subr.bf16.mxu0 0
      %399 = vmatpush1.bf16.msra.mxu0 0
      %400 = vmatprep.subr.bf16.mxu0 0
      %401 = vmatpush1.bf16.msra.mxu0 0
      %402 = vmatprep.subr.bf16.mxu0 0
      %403 = vmatpush1.bf16.msra.mxu0 0
      %404 = vmatprep.mubr.bf16.mxu0 0
      %405 = vmatmul.mubr.bf16.gmra.mrb[0].mxu0 %v370
      %v406 = vpop.f32.mrb[0].mxu0
      %v407 = vadd.f32 0.0, %v406
      %v408 = vpop.f32.mrb[0].mxu0
      %v409 = vpop.f32.mrb[0].mxu0
      %v410 = vpop.f32.mrb[0].mxu0
      %411 = vdwg.mxu0
      %412 = vst.msk [vmem:[%s295] sm:$0xff] %vm362, %v407
      %v413 = vld [vmem:[%s4] sm:$0xf]
      %v414 = vpack.c.bf16 %v413, %v413
      %v416 = vsel %vm368, %v414, 0
      %418 = vmatprep.subr.bf16.mxu0 0
      %419 = vmatpush1.bf16.msra.mxu0 %v367
      %420 = vmatprep.subr.bf16.mxu0 0
      %421 = vmatpush1.bf16.msra.mxu0 0
      %422 = vmatprep.subr.bf16.mxu0 0
      %423 = vmatpush1.bf16.msra.mxu0 0
      %424 = vmatprep.subr.bf16.mxu0 0
      %425 = vmatpush1.bf16.msra.mxu0 0
      %426 = vmatprep.subr.bf16.mxu0 0
      %427 = vmatpush1.bf16.msra.mxu0 0
      %428 = vmatprep.subr.bf16.mxu0 0
      %429 = vmatpush1.bf16.msra.mxu0 0
      %430 = vmatprep.subr.bf16.mxu0 0
      %431 = vmatpush1.bf16.msra.mxu0 0
      %432 = vmatprep.subr.bf16.mxu0 0
      %433 = vmatpush1.bf16.msra.mxu0 0
      %434 = vmatprep.subr.bf16.mxu0 0
      %435 = vmatpush1.bf16.msra.mxu0 0
      %436 = vmatprep.subr.bf16.mxu0 0
      %437 = vmatpush1.bf16.msra.mxu0 0
      %438 = vmatprep.subr.bf16.mxu0 0
      %439 = vmatpush1.bf16.msra.mxu0 0
      %440 = vmatprep.subr.bf16.mxu0 0
      %441 = vmatpush1.bf16.msra.mxu0 0
      %442 = vmatprep.subr.bf16.mxu0 0
      %443 = vmatpush1.bf16.msra.mxu0 0
      %444 = vmatprep.subr.bf16.mxu0 0
      %445 = vmatpush1.bf16.msra.mxu0 0
      %446 = vmatprep.subr.bf16.mxu0 0
      %447 = vmatpush1.bf16.msra.mxu0 0
      %448 = vmatprep.subr.bf16.mxu0 0
      %449 = vmatpush1.bf16.msra.mxu0 0
      %450 = vmatprep.mubr.bf16.mxu0 0
      %451 = vmatmul.mubr.bf16.gmra.mrb[0].mxu0 %v416
      %v452 = vpop.f32.mrb[0].mxu0
      %v453 = vadd.f32 0.0, %v452
      %v454 = vpop.f32.mrb[0].mxu0
      %v455 = vpop.f32.mrb[0].mxu0
      %v456 = vpop.f32.mrb[0].mxu0
      %457 = vdwg.mxu0
      %vm458 = vcmask 257024
      %459 = vst.msk [vmem:[%s299] sm:$0xf] %vm458, %v453
      %p460 = scmp.lt.s32.totalorder %s19, 1
      %s461 = scalar_select %p460, %s19, 1
      %s462 = smul.addr %s461, 2
      %s463 = smul.addr %s462, 8
      %s464 = scalar_lea.vmem %s5, %s463
      %p465 = scmp.lt.s32.totalorder %s19, 1
      %s466 = scalar_select %p465, %s19, 1
      %s467 = smul.addr %s466, 8
      %s468 = scalar_lea.vmem %s6, %s467
      %p469 = scmp.lt.s32.totalorder %s19, 1
      %s470 = scalar_select %p469, %s19, 1
      %s471 = smul.addr %s470, 4
      %s472 = scalar_lea.vmem %s7, %s471
      // Predicated region
      $region41: #{timemixer_forward.4} parent=39 // pred_check
        %p473 = pneg %p147
      $region42: #{timemixer_forward.4} parent=39 // pred_check_branch
        %475 = sbr.rel (%p473) target = $region44
      $region43: #{timemixer_forward.4} parent=39 // pred_region
        _
      $region44: #{timemixer_forward.4} parent=39 // pred_fallthru
        _
      // Predicated region
      $region45: #{timemixer_forward.4} parent=39 // pred_check
        %p476 = pneg %p173
      $region46: #{timemixer_forward.4} parent=39 // pred_check_branch
        %478 = sbr.rel (%p476) target = $region48
      $region47: #{timemixer_forward.4} parent=39 // pred_region
        _
      $region48: #{timemixer_forward.4} parent=39 // pred_fallthru
        _
      // Predicated region
      $region49: #{timemixer_forward.4} parent=39 // pred_check
        %p479 = pneg %p199
      $region50: #{timemixer_forward.4} parent=39 // pred_check_branch
        %481 = sbr.rel (%p479) target = $region52
      $region51: #{timemixer_forward.4} parent=39 // pred_region
        _
      $region52: #{timemixer_forward.4} parent=39 // pred_fallthru
        _
    $region40: #{timemixer_forward.4} parent=5 // pred_fallthru
      _
    %p482 = scmp.le.s32.totalorder 2, %s14
    // Predicated region
    $region53: #{timemixer_forward.4} parent=5 // pred_check
      %p483 = pneg %p482
    $region54: #{timemixer_forward.4} parent=5 // pred_check_branch
      %485 = sbr.rel (%p483) target = $region56
    $region55: #{timemixer_forward.4} parent=5 // pred_region
      %s486 = ssub.s32 %s14, 2
      // Predicated region
      $region57: #{timemixer_forward.4} parent=55 // pred_check
        %p487 = pneg %p153
      $region58: #{timemixer_forward.4} parent=55 // pred_check_branch
        %489 = sbr.rel (%p487) target = $region60
      $region59: #{timemixer_forward.4} parent=55 // pred_region
        %p490 = scmp.lt.s32.totalorder %s20, 1
        %s491 = scalar_select %p490, %s20, 1
        %s492 = smul.addr %s491, 2
        %s493 = smul.addr %s492, 8
        %s494 = scalar_lea.vmem %s5, %s493
      $region60: #{timemixer_forward.4} parent=55 // pred_fallthru
        _
      // Predicated region
      $region61: #{timemixer_forward.4} parent=55 // pred_check
        %p495 = pneg %p179
      $region62: #{timemixer_forward.4} parent=55 // pred_check_branch
        %497 = sbr.rel (%p495) target = $region64
      $region63: #{timemixer_forward.4} parent=55 // pred_region
        %p498 = scmp.lt.s32.totalorder %s20, 1
        %s499 = scalar_select %p498, %s20, 1
        %s500 = smul.addr %s499, 8
        %s501 = scalar_lea.vmem %s6, %s500
      $region64: #{timemixer_forward.4} parent=55 // pred_fallthru
        _
      // Predicated region
      $region65: #{timemixer_forward.4} parent=55 // pred_check
        %p502 = pneg %p205
      $region66: #{timemixer_forward.4} parent=55 // pred_check_branch
        %504 = sbr.rel (%p502) target = $region68
      $region67: #{timemixer_forward.4} parent=55 // pred_region
        %p505 = scmp.lt.s32.totalorder %s20, 1
        %s506 = scalar_select %p505, %s20, 1
        %s507 = smul.addr %s506, 4
        %s508 = scalar_lea.vmem %s7, %s507
      $region68: #{timemixer_forward.4} parent=55 // pred_fallthru
        _
    $region56: #{timemixer_forward.4} parent=5 // pred_fallthru
      _
  $region6: #{timemixer_forward.4} parent=0 // loop_footer
    %s18 = sadd.s32 1, %s14
  $region7: #{timemixer_forward.4} parent=0 // loop_footer_branch
    %13 = sbr.rel target = $region3
  $region8: #{timemixer_forward.4} parent=0 // loop_exit
    _

// kernel: timemixer_forward.5
$region0: #{timemixer_forward.5}
  #allocation0 [shape = 'u32[]', space=smem, size = 0x4, offset = 0x4, fixed_abs, tag = 'smem constant byte address 0x4 - core index']
  #allocation1 [shape = 'u32[144,128]{1,0:T(1,128)}', space=vmem, size = 0x12000, scoped, tag = 'internal scratch']
  %s0 = inlined_call_operand.vmem [shape: f32[2,16,32], index: 0, kind: input, shape index: {}, may-alias: {0,13}]
  %s1 = inlined_call_operand.vmem [shape: f32[2,8,32], index: 1, kind: input, shape index: {}, may-alias: {1,14}]
  %s2 = inlined_call_operand.vmem [shape: f32[2,4,32], index: 2, kind: input, shape index: {}, may-alias: {2,15}]
  %s3 = inlined_call_operand.vmem [shape: f32[32,32], index: 3, kind: input, shape index: {}]
  %s4 = inlined_call_operand.vmem [shape: f32[16,32], index: 4, kind: input, shape index: {}]
  %s5 = inlined_call_operand.vmem [shape: f32[16,8], index: 5, kind: input, shape index: {}]
  %s6 = inlined_call_operand.vmem [shape: f32[16,4], index: 6, kind: input, shape index: {}]
  %s7 = inlined_call_operand.vmem [shape: f32[8,32], index: 7, kind: input, shape index: {}]
  %s8 = inlined_call_operand.vmem [shape: f32[8,16], index: 8, kind: input, shape index: {}]
  %s9 = inlined_call_operand.vmem [shape: f32[8,4], index: 9, kind: input, shape index: {}]
  %s10 = inlined_call_operand.vmem [shape: f32[4,32], index: 10, kind: input, shape index: {}]
  %s11 = inlined_call_operand.vmem [shape: f32[4,16], index: 11, kind: input, shape index: {}]
  %s12 = inlined_call_operand.vmem [shape: f32[4,8], index: 12, kind: input, shape index: {}]
  %s13 = inlined_call_operand.vmem [shape: f32[2,16,32], index: 13, kind: output, shape index: {0}, may-alias: {0,13}]
  %s14 = inlined_call_operand.vmem [shape: f32[2,8,32], index: 14, kind: output, shape index: {1}, may-alias: {1,14}]
  %s15 = inlined_call_operand.vmem [shape: f32[2,4,32], index: 15, kind: output, shape index: {2}, may-alias: {2,15}]
  %16 = xla_tuple %s13, %s14, %s15
  %s17 = sld [smem:[#allocation0]]
  $region101: #{timemixer_forward.5} parent=0
    _
  %s19 = ssub.s32 1, %s17
  %s20 = scalar_select 0, %s19, %s17
  loop: start=0, step=1, limit=4
  $region2: #{timemixer_forward.5} parent=0 // loop_pre_header
    _
  $region3: #{timemixer_forward.5} parent=0 // loop_header
    %s22 = sphi 0, %s26
    %p23 = scmp.ge.s32.totalorder %s22, 4
    %s32 = sphi 0, %s34
    %s35 = sphi 0, %s32
    %s36 = sphi 0, %s35
    %s52 = sphi 0, %s36
    %s58 = sphi 0, %s60
    %s61 = sphi 0, %s58
    %s62 = sphi 0, %s61
    %s78 = sphi 0, %s62
    %s84 = sphi 0, %s86
    %s87 = sphi 0, %s84
    %s88 = sphi 0, %s87
    %s104 = sphi 0, %s88
    %s108 = sphi 0, %s108
    %s110 = sphi 0, %s108
    %s111 = sphi 0, %s110
    %s125 = sphi 0, %s111
    %s129 = sphi 0, %s129
    %s131 = sphi 0, %s129
    %s132 = sphi 0, %s131
    %s146 = sphi 0, %s132
    %s150 = sphi 0, %s150
    %s152 = sphi 0, %s150
    %s153 = sphi 0, %s152
    %s167 = sphi 0, %s153
    %s171 = sphi 0, %s171
    %s173 = sphi 0, %s171
    %s174 = sphi 0, %s173
    %s188 = sphi 0, %s174
    %s192 = sphi 0, %s192
    %s194 = sphi 0, %s192
    %s195 = sphi 0, %s194
    %s209 = sphi 0, %s195
    %s213 = sphi 0, %s213
    %s215 = sphi 0, %s213
    %s216 = sphi 0, %s215
    %s230 = sphi 0, %s216
    %s234 = sphi 0, %s234
    %s236 = sphi 0, %s234
    %s237 = sphi 0, %s236
    %s251 = sphi 0, %s237
    %s255 = sphi 0, %s255
    %s257 = sphi 0, %s255
    %s258 = sphi 0, %s257
    %s272 = sphi 0, %s258
    %s276 = sphi 0, %s276
    %s278 = sphi 0, %s276
    %s279 = sphi 0, %s278
    %s293 = sphi 0, %s279
    %s297 = sphi 0, %s297
    %s299 = sphi 0, %s297
    %s300 = sphi 0, %s299
    %s314 = sphi 0, %s300
    %s320 = sphi 0, %s322
    %s323 = sphi 0, %s320
    %s324 = sphi 0, %s323
    %s340 = sphi 0, %s324
    %s346 = sphi 0, %s348
    %s349 = sphi 0, %s346
    %s350 = sphi 0, %s349
    %s366 = sphi 0, %s350
    %s372 = sphi 0, %s374
    %s375 = sphi 0, %s372
    %s376 = sphi 0, %s375
    %s392 = sphi 0, %s376
  $region4: #{timemixer_forward.5} parent=0 // loop_header_branch
    %25 = sbr.rel (%p23) target = $region8
  $region5: #{timemixer_forward.5} parent=0 // loop_body
    %s27 = ssub.s32 %s22, 1
    %s28 = ssub.s32 %s22, 2
    %s29 = sadd.s32 %s22, 1
    %s30 = ssub.s32 %s22, %s29
    %p31 = scmp.eq.s32.totalorder %s30, 0
    %s33 = sadd.s32 %s32, 1
    %s34 = scalar_select %p31, %s32, %s33
    %p37 = pneg %p31
    %p38 = scmp.eq.s32.totalorder %s22, 1
    %p39 = por %p37, %p38
    %p40 = scmp.ne.s32.totalorder %s32, %s35
    %p41 = scmp.eq.s32.totalorder %s22, 0
    %p42 = por %p40, %p41
    %p43 = scmp.ne.s32.totalorder %s32, %s35
    %p44 = scmp.eq.s32.totalorder %s27, 1
    %p45 = por %p43, %p44
    %p46 = scmp.ne.s32.totalorder %s35, %s36
    %p47 = scmp.eq.s32.totalorder %s27, 0
    %p48 = por %p46, %p47
    %p49 = scmp.ne.s32.totalorder %s35, %s36
    %p50 = scmp.eq.s32.totalorder %s28, 1
    %p51 = por %p49, %p50
    %p53 = scmp.ne.s32.totalorder %s36, %s52
    %p54 = scmp.eq.s32.totalorder %s28, 0
    %p55 = por %p53, %p54
    %s56 = ssub.s32 %s22, %s29
    %p57 = scmp.eq.s32.totalorder %s56, 0
    %s59 = sadd.s32 %s58, 1
    %s60 = scalar_select %p57, %s58, %s59
    %p63 = pneg %p57
    %p64 = scmp.eq.s32.totalorder %s22, 1
    %p65 = por %p63, %p64
    %p66 = scmp.ne.s32.totalorder %s58, %s61
    %p67 = scmp.eq.s32.totalorder %s22, 0
    %p68 = por %p66, %p67
    %p69 = scmp.ne.s32.totalorder %s58, %s61
    %p70 = scmp.eq.s32.totalorder %s27, 1
    %p71 = por %p69, %p70
    %p72 = scmp.ne.s32.totalorder %s61, %s62
    %p73 = scmp.eq.s32.totalorder %s27, 0
    %p74 = por %p72, %p73
    %p75 = scmp.ne.s32.totalorder %s61, %s62
    %p76 = scmp.eq.s32.totalorder %s28, 1
    %p77 = por %p75, %p76
    %p79 = scmp.ne.s32.totalorder %s62, %s78
    %p80 = scmp.eq.s32.totalorder %s28, 0
    %p81 = por %p79, %p80
    %s82 = ssub.s32 %s22, %s29
    %p83 = scmp.eq.s32.totalorder %s82, 0
    %s85 = sadd.s32 %s84, 1
    %s86 = scalar_select %p83, %s84, %s85
    %p89 = pneg %p83
    %p90 = scmp.eq.s32.totalorder %s22, 1
    %p91 = por %p89, %p90
    %p92 = scmp.ne.s32.totalorder %s84, %s87
    %p93 = scmp.eq.s32.totalorder %s22, 0
    %p94 = por %p92, %p93
    %p95 = scmp.ne.s32.totalorder %s84, %s87
    %p96 = scmp.eq.s32.totalorder %s27, 1
    %p97 = por %p95, %p96
    %p98 = scmp.ne.s32.totalorder %s87, %s88
    %p99 = scmp.eq.s32.totalorder %s27, 0
    %p100 = por %p98, %p99
    %p101 = scmp.ne.s32.totalorder %s87, %s88
    %p102 = scmp.eq.s32.totalorder %s28, 1
    %p103 = por %p101, %p102
    %p105 = scmp.ne.s32.totalorder %s88, %s104
    %p106 = scmp.eq.s32.totalorder %s28, 0
    %p107 = por %p105, %p106
    %s109 = sadd.s32 %s108, 1
    %p112 = scmp.eq.s32.totalorder %s22, 1
    %p113 = scmp.ne.s32.totalorder %s108, %s110
    %p114 = scmp.eq.s32.totalorder %s22, 0
    %p115 = por %p113, %p114
    %p116 = scmp.ne.s32.totalorder %s108, %s110
    %p117 = scmp.eq.s32.totalorder %s27, 1
    %p118 = por %p116, %p117
    %p119 = scmp.ne.s32.totalorder %s110, %s111
    %p120 = scmp.eq.s32.totalorder %s27, 0
    %p121 = por %p119, %p120
    %p122 = scmp.ne.s32.totalorder %s110, %s111
    %p123 = scmp.eq.s32.totalorder %s28, 1
    %p124 = por %p122, %p123
    %p126 = scmp.ne.s32.totalorder %s111, %s125
    %p127 = scmp.eq.s32.totalorder %s28, 0
    %p128 = por %p126, %p127
    %s130 = sadd.s32 %s129, 1
    %p133 = scmp.eq.s32.totalorder %s22, 1
    %p134 = scmp.ne.s32.totalorder %s129, %s131
    %p135 = scmp.eq.s32.totalorder %s22, 0
    %p136 = por %p134, %p135
    %p137 = scmp.ne.s32.totalorder %s129, %s131
    %p138 = scmp.eq.s32.totalorder %s27, 1
    %p139 = por %p137, %p138
    %p140 = scmp.ne.s32.totalorder %s131, %s132
    %p141 = scmp.eq.s32.totalorder %s27, 0
    %p142 = por %p140, %p141
    %p143 = scmp.ne.s32.totalorder %s131, %s132
    %p144 = scmp.eq.s32.totalorder %s28, 1
    %p145 = por %p143, %p144
    %p147 = scmp.ne.s32.totalorder %s132, %s146
    %p148 = scmp.eq.s32.totalorder %s28, 0
    %p149 = por %p147, %p148
    %s151 = sadd.s32 %s150, 1
    %p154 = scmp.eq.s32.totalorder %s22, 1
    %p155 = scmp.ne.s32.totalorder %s150, %s152
    %p156 = scmp.eq.s32.totalorder %s22, 0
    %p157 = por %p155, %p156
    %p158 = scmp.ne.s32.totalorder %s150, %s152
    %p159 = scmp.eq.s32.totalorder %s27, 1
    %p160 = por %p158, %p159
    %p161 = scmp.ne.s32.totalorder %s152, %s153
    %p162 = scmp.eq.s32.totalorder %s27, 0
    %p163 = por %p161, %p162
    %p164 = scmp.ne.s32.totalorder %s152, %s153
    %p165 = scmp.eq.s32.totalorder %s28, 1
    %p166 = por %p164, %p165
    %p168 = scmp.ne.s32.totalorder %s153, %s167
    %p169 = scmp.eq.s32.totalorder %s28, 0
    %p170 = por %p168, %p169
    %s172 = sadd.s32 %s171, 1
    %p175 = scmp.eq.s32.totalorder %s22, 1
    %p176 = scmp.ne.s32.totalorder %s171, %s173
    %p177 = scmp.eq.s32.totalorder %s22, 0
    %p178 = por %p176, %p177
    %p179 = scmp.ne.s32.totalorder %s171, %s173
    %p180 = scmp.eq.s32.totalorder %s27, 1
    %p181 = por %p179, %p180
    %p182 = scmp.ne.s32.totalorder %s173, %s174
    %p183 = scmp.eq.s32.totalorder %s27, 0
    %p184 = por %p182, %p183
    %p185 = scmp.ne.s32.totalorder %s173, %s174
    %p186 = scmp.eq.s32.totalorder %s28, 1
    %p187 = por %p185, %p186
    %p189 = scmp.ne.s32.totalorder %s174, %s188
    %p190 = scmp.eq.s32.totalorder %s28, 0
    %p191 = por %p189, %p190
    %s193 = sadd.s32 %s192, 1
    %p196 = scmp.eq.s32.totalorder %s22, 1
    %p197 = scmp.ne.s32.totalorder %s192, %s194
    %p198 = scmp.eq.s32.totalorder %s22, 0
    %p199 = por %p197, %p198
    %p200 = scmp.ne.s32.totalorder %s192, %s194
    %p201 = scmp.eq.s32.totalorder %s27, 1
    %p202 = por %p200, %p201
    %p203 = scmp.ne.s32.totalorder %s194, %s195
    %p204 = scmp.eq.s32.totalorder %s27, 0
    %p205 = por %p203, %p204
    %p206 = scmp.ne.s32.totalorder %s194, %s195
    %p207 = scmp.eq.s32.totalorder %s28, 1
    %p208 = por %p206, %p207
    %p210 = scmp.ne.s32.totalorder %s195, %s209
    %p211 = scmp.eq.s32.totalorder %s28, 0
    %p212 = por %p210, %p211
    %s214 = sadd.s32 %s213, 1
    %p217 = scmp.eq.s32.totalorder %s22, 1
    %p218 = scmp.ne.s32.totalorder %s213, %s215
    %p219 = scmp.eq.s32.totalorder %s22, 0
    %p220 = por %p218, %p219
    %p221 = scmp.ne.s32.totalorder %s213, %s215
    %p222 = scmp.eq.s32.totalorder %s27, 1
    %p223 = por %p221, %p222
    %p224 = scmp.ne.s32.totalorder %s215, %s216
    %p225 = scmp.eq.s32.totalorder %s27, 0
    %p226 = por %p224, %p225
    %p227 = scmp.ne.s32.totalorder %s215, %s216
    %p228 = scmp.eq.s32.totalorder %s28, 1
    %p229 = por %p227, %p228
    %p231 = scmp.ne.s32.totalorder %s216, %s230
    %p232 = scmp.eq.s32.totalorder %s28, 0
    %p233 = por %p231, %p232
    %s235 = sadd.s32 %s234, 1
    %p238 = scmp.eq.s32.totalorder %s22, 1
    %p239 = scmp.ne.s32.totalorder %s234, %s236
    %p240 = scmp.eq.s32.totalorder %s22, 0
    %p241 = por %p239, %p240
    %p242 = scmp.ne.s32.totalorder %s234, %s236
    %p243 = scmp.eq.s32.totalorder %s27, 1
    %p244 = por %p242, %p243
    %p245 = scmp.ne.s32.totalorder %s236, %s237
    %p246 = scmp.eq.s32.totalorder %s27, 0
    %p247 = por %p245, %p246
    %p248 = scmp.ne.s32.totalorder %s236, %s237
    %p249 = scmp.eq.s32.totalorder %s28, 1
    %p250 = por %p248, %p249
    %p252 = scmp.ne.s32.totalorder %s237, %s251
    %p253 = scmp.eq.s32.totalorder %s28, 0
    %p254 = por %p252, %p253
    %s256 = sadd.s32 %s255, 1
    %p259 = scmp.eq.s32.totalorder %s22, 1
    %p260 = scmp.ne.s32.totalorder %s255, %s257
    %p261 = scmp.eq.s32.totalorder %s22, 0
    %p262 = por %p260, %p261
    %p263 = scmp.ne.s32.totalorder %s255, %s257
    %p264 = scmp.eq.s32.totalorder %s27, 1
    %p265 = por %p263, %p264
    %p266 = scmp.ne.s32.totalorder %s257, %s258
    %p267 = scmp.eq.s32.totalorder %s27, 0
    %p268 = por %p266, %p267
    %p269 = scmp.ne.s32.totalorder %s257, %s258
    %p270 = scmp.eq.s32.totalorder %s28, 1
    %p271 = por %p269, %p270
    %p273 = scmp.ne.s32.totalorder %s258, %s272
    %p274 = scmp.eq.s32.totalorder %s28, 0
    %p275 = por %p273, %p274
    %s277 = sadd.s32 %s276, 1
    %p280 = scmp.eq.s32.totalorder %s22, 1
    %p281 = scmp.ne.s32.totalorder %s276, %s278
    %p282 = scmp.eq.s32.totalorder %s22, 0
    %p283 = por %p281, %p282
    %p284 = scmp.ne.s32.totalorder %s276, %s278
    %p285 = scmp.eq.s32.totalorder %s27, 1
    %p286 = por %p284, %p285
    %p287 = scmp.ne.s32.totalorder %s278, %s279
    %p288 = scmp.eq.s32.totalorder %s27, 0
    %p289 = por %p287, %p288
    %p290 = scmp.ne.s32.totalorder %s278, %s279
    %p291 = scmp.eq.s32.totalorder %s28, 1
    %p292 = por %p290, %p291
    %p294 = scmp.ne.s32.totalorder %s279, %s293
    %p295 = scmp.eq.s32.totalorder %s28, 0
    %p296 = por %p294, %p295
    %s298 = sadd.s32 %s297, 1
    %p301 = scmp.eq.s32.totalorder %s22, 1
    %p302 = scmp.ne.s32.totalorder %s297, %s299
    %p303 = scmp.eq.s32.totalorder %s22, 0
    %p304 = por %p302, %p303
    %p305 = scmp.ne.s32.totalorder %s297, %s299
    %p306 = scmp.eq.s32.totalorder %s27, 1
    %p307 = por %p305, %p306
    %p308 = scmp.ne.s32.totalorder %s299, %s300
    %p309 = scmp.eq.s32.totalorder %s27, 0
    %p310 = por %p308, %p309
    %p311 = scmp.ne.s32.totalorder %s299, %s300
    %p312 = scmp.eq.s32.totalorder %s28, 1
    %p313 = por %p311, %p312
    %p315 = scmp.ne.s32.totalorder %s300, %s314
    %p316 = scmp.eq.s32.totalorder %s28, 0
    %p317 = por %p315, %p316
    %s318 = ssub.s32 %s22, %s29
    %p319 = scmp.eq.s32.totalorder %s318, 0
    %s321 = sadd.s32 %s320, 1
    %s322 = scalar_select %p319, %s320, %s321
    %p325 = pneg %p319
    %p326 = scmp.eq.s32.totalorder %s22, 1
    %p327 = por %p325, %p326
    %p328 = scmp.ne.s32.totalorder %s320, %s323
    %p329 = scmp.eq.s32.totalorder %s22, 0
    %p330 = por %p328, %p329
    %p331 = scmp.ne.s32.totalorder %s320, %s323
    %p332 = scmp.eq.s32.totalorder %s27, 1
    %p333 = por %p331, %p332
    %p334 = scmp.ne.s32.totalorder %s323, %s324
    %p335 = scmp.eq.s32.totalorder %s27, 0
    %p336 = por %p334, %p335
    %p337 = scmp.ne.s32.totalorder %s323, %s324
    %p338 = scmp.eq.s32.totalorder %s28, 1
    %p339 = por %p337, %p338
    %p341 = scmp.ne.s32.totalorder %s324, %s340
    %p342 = scmp.eq.s32.totalorder %s28, 0
    %p343 = por %p341, %p342
    %s344 = ssub.s32 %s22, %s29
    %p345 = scmp.eq.s32.totalorder %s344, 0
    %s347 = sadd.s32 %s346, 1
    %s348 = scalar_select %p345, %s346, %s347
    %p351 = pneg %p345
    %p352 = scmp.eq.s32.totalorder %s22, 1
    %p353 = por %p351, %p352
    %p354 = scmp.ne.s32.totalorder %s346, %s349
    %p355 = scmp.eq.s32.totalorder %s22, 0
    %p356 = por %p354, %p355
    %p357 = scmp.ne.s32.totalorder %s346, %s349
    %p358 = scmp.eq.s32.totalorder %s27, 1
    %p359 = por %p357, %p358
    %p360 = scmp.ne.s32.totalorder %s349, %s350
    %p361 = scmp.eq.s32.totalorder %s27, 0
    %p362 = por %p360, %p361
    %p363 = scmp.ne.s32.totalorder %s349, %s350
    %p364 = scmp.eq.s32.totalorder %s28, 1
    %p365 = por %p363, %p364
    %p367 = scmp.ne.s32.totalorder %s350, %s366
    %p368 = scmp.eq.s32.totalorder %s28, 0
    %p369 = por %p367, %p368
    %s370 = ssub.s32 %s22, %s29
    %p371 = scmp.eq.s32.totalorder %s370, 0
    %s373 = sadd.s32 %s372, 1
    %s374 = scalar_select %p371, %s372, %s373
    %p377 = pneg %p371
    %p378 = scmp.eq.s32.totalorder %s22, 1
    %p379 = por %p377, %p378
    %p380 = scmp.ne.s32.totalorder %s372, %s375
    %p381 = scmp.eq.s32.totalorder %s22, 0
    %p382 = por %p380, %p381
    %p383 = scmp.ne.s32.totalorder %s372, %s375
    %p384 = scmp.eq.s32.totalorder %s27, 1
    %p385 = por %p383, %p384
    %p386 = scmp.ne.s32.totalorder %s375, %s376
    %p387 = scmp.eq.s32.totalorder %s27, 0
    %p388 = por %p386, %p387
    %p389 = scmp.ne.s32.totalorder %s375, %s376
    %p390 = scmp.eq.s32.totalorder %s28, 1
    %p391 = por %p389, %p390
    %p393 = scmp.ne.s32.totalorder %s376, %s392
    %p394 = scmp.eq.s32.totalorder %s28, 0
    %p395 = por %p393, %p394
    %p396 = scmp.le.s32.totalorder 1, %s22
    %p397 = scmp.lt.s32.totalorder %s22, 3
    %p398 = pnand %p396, %p397
    %p399 = pneg %p398
    // Predicated region
    $region9: #{timemixer_forward.5} parent=5 // pred_check
      _
    $region10: #{timemixer_forward.5} parent=5 // pred_check_branch
      %401 = sbr.rel (%p398) target = $region12
    $region11: #{timemixer_forward.5} parent=5 // pred_region
      %s402 = ssub.s32 %s22, 1
      // Predicated region
      $region13: #{timemixer_forward.5} parent=11 // pred_check
        %p403 = pneg %p121
      $region14: #{timemixer_forward.5} parent=11 // pred_check_branch
        %405 = sbr.rel (%p403) target = $region16
      $region15: #{timemixer_forward.5} parent=11 // pred_region
        _
      $region16: #{timemixer_forward.5} parent=11 // pred_fallthru
        _
      // Predicated region
      $region17: #{timemixer_forward.5} parent=11 // pred_check
        %p406 = pneg %p142
      $region18: #{timemixer_forward.5} parent=11 // pred_check_branch
        %408 = sbr.rel (%p406) target = $region20
      $region19: #{timemixer_forward.5} parent=11 // pred_region
        _
      $region20: #{timemixer_forward.5} parent=11 // pred_fallthru
        _
      // Predicated region
      $region21: #{timemixer_forward.5} parent=11 // pred_check
        %p409 = pneg %p163
      $region22: #{timemixer_forward.5} parent=11 // pred_check_branch
        %411 = sbr.rel (%p409) target = $region24
      $region23: #{timemixer_forward.5} parent=11 // pred_region
        _
      $region24: #{timemixer_forward.5} parent=11 // pred_fallthru
        _
      // Predicated region
      $region25: #{timemixer_forward.5} parent=11 // pred_check
        %p412 = pneg %p184
      $region26: #{timemixer_forward.5} parent=11 // pred_check_branch
        %414 = sbr.rel (%p412) target = $region28
      $region27: #{timemixer_forward.5} parent=11 // pred_region
        _
      $region28: #{timemixer_forward.5} parent=11 // pred_fallthru
        _
      // Predicated region
      $region29: #{timemixer_forward.5} parent=11 // pred_check
        %p415 = pneg %p205
      $region30: #{timemixer_forward.5} parent=11 // pred_check_branch
        %417 = sbr.rel (%p415) target = $region32
      $region31: #{timemixer_forward.5} parent=11 // pred_region
        _
      $region32: #{timemixer_forward.5} parent=11 // pred_fallthru
        _
      // Predicated region
      $region33: #{timemixer_forward.5} parent=11 // pred_check
        %p418 = pneg %p226
      $region34: #{timemixer_forward.5} parent=11 // pred_check_branch
        %420 = sbr.rel (%p418) target = $region36
      $region35: #{timemixer_forward.5} parent=11 // pred_region
        _
      $region36: #{timemixer_forward.5} parent=11 // pred_fallthru
        _
      // Predicated region
      $region37: #{timemixer_forward.5} parent=11 // pred_check
        %p421 = pneg %p247
      $region38: #{timemixer_forward.5} parent=11 // pred_check_branch
        %423 = sbr.rel (%p421) target = $region40
      $region39: #{timemixer_forward.5} parent=11 // pred_region
        _
      $region40: #{timemixer_forward.5} parent=11 // pred_fallthru
        _
      // Predicated region
      $region41: #{timemixer_forward.5} parent=11 // pred_check
        %p424 = pneg %p268
      $region42: #{timemixer_forward.5} parent=11 // pred_check_branch
        %426 = sbr.rel (%p424) target = $region44
      $region43: #{timemixer_forward.5} parent=11 // pred_region
        _
      $region44: #{timemixer_forward.5} parent=11 // pred_fallthru
        _
      // Predicated region
      $region45: #{timemixer_forward.5} parent=11 // pred_check
        %p427 = pneg %p289
      $region46: #{timemixer_forward.5} parent=11 // pred_check_branch
        %429 = sbr.rel (%p427) target = $region48
      $region47: #{timemixer_forward.5} parent=11 // pred_region
        _
      $region48: #{timemixer_forward.5} parent=11 // pred_fallthru
        _
      // Predicated region
      $region49: #{timemixer_forward.5} parent=11 // pred_check
        %p430 = pneg %p310
      $region50: #{timemixer_forward.5} parent=11 // pred_check_branch
        %432 = sbr.rel (%p430) target = $region52
      $region51: #{timemixer_forward.5} parent=11 // pred_region
        _
      $region52: #{timemixer_forward.5} parent=11 // pred_fallthru
        _
    $region12: #{timemixer_forward.5} parent=5 // pred_fallthru
      _
    %p433 = scmp.lt.s32.totalorder %s22, 2
    // Predicated region
    $region53: #{timemixer_forward.5} parent=5 // pred_check
      %p434 = pneg %p433
    $region54: #{timemixer_forward.5} parent=5 // pred_check_branch
      %436 = sbr.rel (%p434) target = $region56
    $region55: #{timemixer_forward.5} parent=5 // pred_region
      // Predicated region
      $region57: #{timemixer_forward.5} parent=55 // pred_check
        %p437 = pneg %p42
      $region58: #{timemixer_forward.5} parent=55 // pred_check_branch
        %439 = sbr.rel (%p437) target = $region60
      $region59: #{timemixer_forward.5} parent=55 // pred_region
        %p440 = scmp.lt.s32.totalorder %s22, 1
        %s441 = scalar_select %p440, %s22, 1
        %s442 = smul.addr %s441, 2
        %s443 = smul.addr %s442, 8
        %s444 = scalar_lea.vmem %s0, %s443
      $region60: #{timemixer_forward.5} parent=55 // pred_fallthru
        _
      // Predicated region
      $region61: #{timemixer_forward.5} parent=55 // pred_check
        %p445 = pneg %p68
      $region62: #{timemixer_forward.5} parent=55 // pred_check_branch
        %447 = sbr.rel (%p445) target = $region64
      $region63: #{timemixer_forward.5} parent=55 // pred_region
        %p448 = scmp.lt.s32.totalorder %s22, 1
        %s449 = scalar_select %p448, %s22, 1
        %s450 = smul.addr %s449, 8
        %s451 = scalar_lea.vmem %s1, %s450
      $region64: #{timemixer_forward.5} parent=55 // pred_fallthru
        _
      // Predicated region
      $region65: #{timemixer_forward.5} parent=55 // pred_check
        %p452 = pneg %p94
      $region66: #{timemixer_forward.5} parent=55 // pred_check_branch
        %454 = sbr.rel (%p452) target = $region68
      $region67: #{timemixer_forward.5} parent=55 // pred_region
        %p455 = scmp.lt.s32.totalorder %s22, 1
        %s456 = scalar_select %p455, %s22, 1
        %s457 = smul.addr %s456, 4
        %s458 = scalar_lea.vmem %s2, %s457
      $region68: #{timemixer_forward.5} parent=55 // pred_fallthru
        _
    $region56: #{timemixer_forward.5} parent=5 // pred_fallthru
      _
    %p459 = scmp.le.s32.totalorder 1, %s22
    %p460 = scmp.lt.s32.totalorder %s22, 3
    %p461 = pnand %p459, %p460
    %p462 = pneg %p461
    // Predicated region
    $region69: #{timemixer_forward.5} parent=5 // pred_check
      _
    $region70: #{timemixer_forward.5} parent=5 // pred_check_branch
      %464 = sbr.rel (%p461) target = $region72
    $region71: #{timemixer_forward.5} parent=5 // pred_region
      %s465 = ssub.s32 %s22, 1
      %p466 = scmp.lt.s32.totalorder %s27, 1
      %s467 = scalar_select %p466, %s27, 1
      %s468 = smul.addr %s467, 2
      %s469 = smul.addr %s468, 8
      %s470 = scalar_lea.vmem %s0, %s469
      %p471 = pneg %p48
      %p472 = pneg %p45
      %p473 = scmp.lt.s32.totalorder %s27, 1
      %s474 = scalar_select %p473, %s27, 1
      %s475 = smul.addr %s474, 8
      %s476 = scalar_lea.vmem %s1, %s475
      %p477 = pneg %p74
      %p478 = pneg %p71
      %p479 = scmp.lt.s32.totalorder %s27, 1
      %s480 = scalar_select %p479, %s27, 1
      %s481 = smul.addr %s480, 4
      %s482 = scalar_lea.vmem %s2, %s481
      %p483 = pneg %p100
      %p484 = pneg %p97
      %p485 = pneg %p121
      %p486 = pneg %p118
      %p487 = pneg %p142
      %p488 = pneg %p139
      %p489 = pneg %p163
      %p490 = pneg %p160
      %p491 = pneg %p184
      %p492 = pneg %p181
      %p493 = pneg %p205
      %p494 = pneg %p202
      %p495 = pneg %p226
      %p496 = pneg %p223
      %p497 = pneg %p247
      %p498 = pneg %p244
      %p499 = pneg %p268
      %p500 = pneg %p265
      %p501 = pneg %p289
      %p502 = pneg %p286
      %p503 = pneg %p310
      %p504 = pneg %p307
      %p505 = pneg %p336
      %p506 = pneg %p333
      %p507 = scmp.lt.s32.totalorder %s27, 1
      %s508 = scalar_select %p507, %s27, 1
      %s509 = smul.addr %s508, 2
      %s510 = smul.addr %s509, 8
      %s511 = scalar_lea.vmem %s13, %s510
      %p512 = pneg %p362
      %p513 = pneg %p359
      %p514 = scmp.lt.s32.totalorder %s27, 1
      %s515 = scalar_select %p514, %s27, 1
      %s516 = smul.addr %s515, 8
      %s517 = scalar_lea.vmem %s14, %s516
      %p518 = pneg %p388
      %p519 = pneg %p385
      %p520 = scmp.lt.s32.totalorder %s27, 1
      %s521 = scalar_select %p520, %s27, 1
      %s522 = smul.addr %s521, 4
      %s523 = scalar_lea.vmem %s15, %s522
      %p524 = scmp.lt.s32.totalorder %s27, 1
      %s525 = scalar_select %p524, %s27, 1
      %s526 = smul.addr %s525, 2
      %s527 = smul.addr %s526, 8
      %s528 = scalar_lea.vmem %s0, %s527
      %p529 = scmp.lt.s32.totalorder %s27, 1
      %s530 = scalar_select %p529, %s27, 1
      %s531 = smul.addr %s530, 8
      %s532 = scalar_lea.vmem %s1, %s531
      %p533 = scmp.lt.s32.totalorder %s27, 1
      %s534 = scalar_select %p533, %s27, 1
      %s535 = smul.addr %s534, 4
      %s536 = scalar_lea.vmem %s2, %s535
      %p537 = scmp.lt.s32.totalorder %s27, 1
      %s538 = scalar_select %p537, %s27, 1
      %s539 = smul.addr %s538, 2
      %s540 = smul.addr %s539, 8
      %s541 = scalar_lea.vmem %s13, %s540
      %p542 = scmp.lt.s32.totalorder %s27, 1
      %s543 = scalar_select %p542, %s27, 1
      %s544 = smul.addr %s543, 8
      %s545 = scalar_lea.vmem %s14, %s544
      %p546 = scmp.lt.s32.totalorder %s27, 1
      %s547 = scalar_select %p546, %s27, 1
      %s548 = smul.addr %s547, 4
      %s549 = scalar_lea.vmem %s15, %s548
      %v551 = vld [vmem:[%s528] sm:$0xff]
      %v552 = vld [vmem:[%s528 + $0x8] sm:$0xff]
      %v553 = vld [vmem:[%s532] sm:$0xff]
      %v554 = vld [vmem:[%s536] sm:$0xf]
      %v555 = vld [vmem:[%s3] sm:$0xff]
      %v556 = vld [vmem:[%s3 + $0x8] sm:$0xff]
      %v557 = vld [vmem:[%s3 + $0x10] sm:$0xff]
      %v558 = vld [vmem:[%s3 + $0x18] sm:$0xff]
      %v559 = vld [vmem:[%s4] sm:$0xff]
      %v560 = vld [vmem:[%s4 + $0x8] sm:$0xff]
      %v561 = vld [vmem:[%s5] sm:$0xff]
      %v562 = vld [vmem:[%s5 + $0x8] sm:$0xff]
      %v563 = vpack.c.bf16 %v562, %v561
      %v564 = vpack.c.bf16 %v553, %v553
      %vm565 = vcmask 64512
      %v567 = vsel %vm565, %v563, 0
      %vm569 = vcmask 1043456
      %v571 = vsel %vm569, %v564, 0
      %573 = vmatprep.subr.bf16.mxu0 0
      %574 = vmatpush1.bf16.msra.mxu0 %v571
      %575 = vmatprep.subr.bf16.mxu0 0
      %576 = vmatpush1.bf16.msra.mxu0 0
      %577 = vmatprep.subr.bf16.mxu0 0
      %578 = vmatpush1.bf16.msra.mxu0 0
      %579 = vmatprep.subr.bf16.mxu0 0
      %580 = vmatpush1.bf16.msra.mxu0 0
      %581 = vmatprep.subr.bf16.mxu0 0
      %582 = vmatpush1.bf16.msra.mxu0 0
      %583 = vmatprep.subr.bf16.mxu0 0
      %584 = vmatpush1.bf16.msra.mxu0 0
      %585 = vmatprep.subr.bf16.mxu0 0
      %586 = vmatpush1.bf16.msra.mxu0 0
      %587 = vmatprep.subr.bf16.mxu0 0
      %588 = vmatpush1.bf16.msra.mxu0 0
      %589 = vmatprep.subr.bf16.mxu0 0
      %590 = vmatpush1.bf16.msra.mxu0 0
      %591 = vmatprep.subr.bf16.mxu0 0
      %592 = vmatpush1.bf16.msra.mxu0 0
      %593 = vmatprep.subr.bf16.mxu0 0
      %594 = vmatpush1.bf16.msra.mxu0 0
      %595 = vmatprep.subr.bf16.mxu0 0
      %596 = vmatpush1.bf16.msra.mxu0 0
      %597 = vmatprep.subr.bf16.mxu0 0
      %598 = vmatpush1.bf16.msra.mxu0 0
      %599 = vmatprep.subr.bf16.mxu0 0
      %600 = vmatpush1.bf16.msra.mxu0 0
      %601 = vmatprep.subr.bf16.mxu0 0
      %602 = vmatpush1.bf16.msra.mxu0 0
      %603 = vmatprep.subr.bf16.mxu0 0
      %604 = vmatpush1.bf16.msra.mxu0 0
      %605 = vmatprep.mubr.bf16.mxu0 0
      %606 = vmatmul.mubr.bf16.gmra.mrb[0].mxu0 %v567
      %v607 = vpop.f32.mrb[0].mxu0
      %v608 = vadd.f32 0.0, %v607
      %v609 = vpop.f32.mrb[0].mxu0
      %v610 = vpop.f32.mrb[0].mxu0
      %v611 = vadd.f32 0.0, %v610
      %v612 = vpop.f32.mrb[0].mxu0
      %613 = vdwg.mxu0
      %v614 = vadd.f32 %v551, %v608
      %v615 = vadd.f32 %v552, %v611
      %v616 = vld [vmem:[%s6] sm:$0xff]
      %v617 = vld [vmem:[%s6 + $0x8] sm:$0xff]
      %v618 = vpack.c.bf16 %v617, %v616
      %v619 = vpack.c.bf16 %v554, %v554
      %vm620 = vcmask 31744
      %v622 = vsel %vm620, %v618, 0
      %vm624 = vcmask 1041408
      %v626 = vsel %vm624, %v619, 0
      %628 = vmatprep.subr.bf16.mxu0 0
      %629 = vmatpush1.bf16.msra.mxu0 %v626
      %630 = vmatprep.subr.bf16.mxu0 0
      %631 = vmatpush1.bf16.msra.mxu0 0
      %632 = vmatprep.subr.bf16.mxu0 0
      %633 = vmatpush1.bf16.msra.mxu0 0
      %634 = vmatprep.subr.bf16.mxu0 0
      %635 = vmatpush1.bf16.msra.mxu0 0
      %636 = vmatprep.subr.bf16.mxu0 0
      %637 = vmatpush1.bf16.msra.mxu0 0
      %638 = vmatprep.subr.bf16.mxu0 0
      %639 = vmatpush1.bf16.msra.mxu0 0
      %640 = vmatprep.subr.bf16.mxu0 0
      %641 = vmatpush1.bf16.msra.mxu0 0
      %642 = vmatprep.subr.bf16.mxu0 0
      %643 = vmatpush1.bf16.msra.mxu0 0
      %644 = vmatprep.subr.bf16.mxu0 0
      %645 = vmatpush1.bf16.msra.mxu0 0
      %646 = vmatprep.subr.bf16.mxu0 0
      %647 = vmatpush1.bf16.msra.mxu0 0
      %648 = vmatprep.subr.bf16.mxu0 0
      %649 = vmatpush1.bf16.msra.mxu0 0
      %650 = vmatprep.subr.bf16.mxu0 0
      %651 = vmatpush1.bf16.msra.mxu0 0
      %652 = vmatprep.subr.bf16.mxu0 0
      %653 = vmatpush1.bf16.msra.mxu0 0
      %654 = vmatprep.subr.bf16.mxu0 0
      %655 = vmatpush1.bf16.msra.mxu0 0
      %656 = vmatprep.subr.bf16.mxu0 0
      %657 = vmatpush1.bf16.msra.mxu0 0
      %658 = vmatprep.subr.bf16.mxu0 0
      %659 = vmatpush1.bf16.msra.mxu0 0
      %660 = vmatprep.mubr.bf16.mxu0 0
      %661 = vmatmul.mubr.bf16.gmra.mrb[0].mxu0 %v622
      %v662 = vpop.f32.mrb[0].mxu0
      %v663 = vadd.f32 0.0, %v662
      %v664 = vpop.f32.mrb[0].mxu0
      %v665 = vpop.f32.mrb[0].mxu0
      %v666 = vadd.f32 0.0, %v665
      %v667 = vpop.f32.mrb[0].mxu0
      %668 = vdwg.mxu0
      %v669 = vadd.f32 %v614, %v663
      %v670 = vadd.f32 %v615, %v666
      %v671 = vpack.c.bf16 %v670, %v669
      %v672 = vpack.c.bf16 %v556, %v555
      %v673 = vpack.c.bf16 %v558, %v557
      %vm674 = vcmask 261120
      %v676 = vsel %vm674, %v671, 0
      %678 = vmatprep.subr.bf16.mxu0 0
      %679 = vmatpush1.bf16.msra.mxu0 %v672
      %680 = vmatprep.subr.bf16.mxu0 0
      %681 = vmatpush1.bf16.msra.mxu0 %v673
      %682 = vmatprep.subr.bf16.mxu0 0
      %683 = vmatpush1.bf16.msra.mxu0 0
      %684 = vmatprep.subr.bf16.mxu0 0
      %685 = vmatpush1.bf16.msra.mxu0 0
      %686 = vmatprep.subr.bf16.mxu0 0
      %687 = vmatpush1.bf16.msra.mxu0 0
      %688 = vmatprep.subr.bf16.mxu0 0
      %689 = vmatpush1.bf16.msra.mxu0 0
      %690 = vmatprep.subr.bf16.mxu0 0
      %691 = vmatpush1.bf16.msra.mxu0 0
      %692 = vmatprep.subr.bf16.mxu0 0
      %693 = vmatpush1.bf16.msra.mxu0 0
      %694 = vmatprep.subr.bf16.mxu0 0
      %695 = vmatpush1.bf16.msra.mxu0 0
      %696 = vmatprep.subr.bf16.mxu0 0
      %697 = vmatpush1.bf16.msra.mxu0 0
      %698 = vmatprep.subr.bf16.mxu0 0
      %699 = vmatpush1.bf16.msra.mxu0 0
      %700 = vmatprep.subr.bf16.mxu0 0
      %701 = vmatpush1.bf16.msra.mxu0 0
      %702 = vmatprep.subr.bf16.mxu0 0
      %703 = vmatpush1.bf16.msra.mxu0 0
      %704 = vmatprep.subr.bf16.mxu0 0
      %705 = vmatpush1.bf16.msra.mxu0 0
      %706 = vmatprep.subr.bf16.mxu0 0
      %707 = vmatpush1.bf16.msra.mxu0 0
      %708 = vmatprep.subr.bf16.mxu0 0
      %709 = vmatpush1.bf16.msra.mxu0 0
      %710 = vmatprep.mubr.bf16.mxu0 0
      %711 = vmatmul.mubr.bf16.gmra.mrb[0].mxu0 %v676
      %v712 = vpop.f32.mrb[0].mxu0
      %v713 = vadd.f32 0.0, %v712
      %v714 = vpop.f32.mrb[0].mxu0
      %v715 = vpop.f32.mrb[0].mxu0
      %v716 = vadd.f32 0.0, %v715
      %v717 = vpop.f32.mrb[0].mxu0
      %718 = vdwg.mxu0
      %v719 = vadd.f32 %v551, %v713
      %v720 = vadd.f32 %v552, %v716
      %v721 = vadd.f32 %v719, %v559
      %v722 = vadd.f32 %v720, %v560
      %723 = vst.msk [vmem:[%s541] sm:$0xff] %vm674, %v721
      %724 = vst.msk [vmem:[%s541 + $0x8] sm:$0xff] %vm674, %v722
      %v725 = vld [vmem:[%s7] sm:$0xff]
      %v726 = vld [vmem:[%s8] sm:$0xff]
      %v727 = vpack.c.bf16 %v726, %v726
      %v728 = vpack.c.bf16 %v552, %v551
      %vm729 = vcmask 130048
      %v731 = vsel %vm729, %v727, 0
      %733 = vmatprep.subr.bf16.mxu0 0
      %734 = vmatpush1.bf16.msra.mxu0 %v728
      %735 = vmatprep.subr.bf16.mxu0 0
      %736 = vmatpush1.bf16.msra.mxu0 0
      %737 = vmatprep.subr.bf16.mxu0 0
      %738 = vmatpush1.bf16.msra.mxu0 0
      %739 = vmatprep.subr.bf16.mxu0 0
      %740 = vmatpush1.bf16.msra.mxu0 0
      %741 = vmatprep.subr.bf16.mxu0 0
      %742 = vmatpush1.bf16.msra.mxu0 0
      %743 = vmatprep.subr.bf16.mxu0 0
      %744 = vmatpush1.bf16.msra.mxu0 0
      %745 = vmatprep.subr.bf16.mxu0 0
      %746 = vmatpush1.bf16.msra.mxu0 0
      %747 = vmatprep.subr.bf16.mxu0 0
      %748 = vmatpush1.bf16.msra.mxu0 0
      %749 = vmatprep.subr.bf16.mxu0 0
      %750 = vmatpush1.bf16.msra.mxu0 0
      %751 = vmatprep.subr.bf16.mxu0 0
      %752 = vmatpush1.bf16.msra.mxu0 0
      %753 = vmatprep.subr.bf16.mxu0 0
      %754 = vmatpush1.bf16.msra.mxu0 0
      %755 = vmatprep.subr.bf16.mxu0 0
      %756 = vmatpush1.bf16.msra.mxu0 0
      %757 = vmatprep.subr.bf16.mxu0 0
      %758 = vmatpush1.bf16.msra.mxu0 0
      %759 = vmatprep.subr.bf16.mxu0 0
      %760 = vmatpush1.bf16.msra.mxu0 0
      %761 = vmatprep.subr.bf16.mxu0 0
      %762 = vmatpush1.bf16.msra.mxu0 0
      %763 = vmatprep.subr.bf16.mxu0 0
      %764 = vmatpush1.bf16.msra.mxu0 0
      %765 = vmatprep.mubr.bf16.mxu0 0
      %766 = vmatmul.mubr.bf16.gmra.mrb[0].mxu0 %v731
      %v767 = vpop.f32.mrb[0].mxu0
      %v768 = vadd.f32 0.0, %v767
      %v769 = vpop.f32.mrb[0].mxu0
      %v770 = vpop.f32.mrb[0].mxu0
      %v771 = vpop.f32.mrb[0].mxu0
      %772 = vdwg.mxu0
      %v773 = vadd.f32 %v553, %v768
      %v774 = vld [vmem:[%s9] sm:$0xff]
      %v775 = vpack.c.bf16 %v774, %v774
      %v777 = vsel %vm620, %v775, 0
      %779 = vmatprep.subr.bf16.mxu0 0
      %780 = vmatpush1.bf16.msra.mxu0 %v626
      %781 = vmatprep.subr.bf16.mxu0 0
      %782 = vmatpush1.bf16.msra.mxu0 0
      %783 = vmatprep.subr.bf16.mxu0 0
      %784 = vmatpush1.bf16.msra.mxu0 0
      %785 = vmatprep.subr.bf16.mxu0 0
      %786 = vmatpush1.bf16.msra.mxu0 0
      %787 = vmatprep.subr.bf16.mxu0 0
      %788 = vmatpush1.bf16.msra.mxu0 0
      %789 = vmatprep.subr.bf16.mxu0 0
      %790 = vmatpush1.bf16.msra.mxu0 0
      %791 = vmatprep.subr.bf16.mxu0 0
      %792 = vmatpush1.bf16.msra.mxu0 0
      %793 = vmatprep.subr.bf16.mxu0 0
      %794 = vmatpush1.bf16.msra.mxu0 0
      %795 = vmatprep.subr.bf16.mxu0 0
      %796 = vmatpush1.bf16.msra.mxu0 0
      %797 = vmatprep.subr.bf16.mxu0 0
      %798 = vmatpush1.bf16.msra.mxu0 0
      %799 = vmatprep.subr.bf16.mxu0 0
      %800 = vmatpush1.bf16.msra.mxu0 0
      %801 = vmatprep.subr.bf16.mxu0 0
      %802 = vmatpush1.bf16.msra.mxu0 0
      %803 = vmatprep.subr.bf16.mxu0 0
      %804 = vmatpush1.bf16.msra.mxu0 0
      %805 = vmatprep.subr.bf16.mxu0 0
      %806 = vmatpush1.bf16.msra.mxu0 0
      %807 = vmatprep.subr.bf16.mxu0 0
      %808 = vmatpush1.bf16.msra.mxu0 0
      %809 = vmatprep.subr.bf16.mxu0 0
      %810 = vmatpush1.bf16.msra.mxu0 0
      %811 = vmatprep.mubr.bf16.mxu0 0
      %812 = vmatmul.mubr.bf16.gmra.mrb[0].mxu0 %v777
      %v813 = vpop.f32.mrb[0].mxu0
      %v814 = vadd.f32 0.0, %v813
      %v815 = vpop.f32.mrb[0].mxu0
      %v816 = vpop.f32.mrb[0].mxu0
      %v817 = vpop.f32.mrb[0].mxu0
      %818 = vdwg.mxu0
      %v819 = vadd.f32 %v773, %v814
      %v820 = vpack.c.bf16 %v819, %v819
      %v822 = vsel %vm674, %v820, 0
      %824 = vmatprep.subr.bf16.mxu0 0
      %825 = vmatpush1.bf16.msra.mxu0 %v672
      %826 = vmatprep.subr.bf16.mxu0 0
      %827 = vmatpush1.bf16.msra.mxu0 %v673
      %828 = vmatprep.subr.bf16.mxu0 0
      %829 = vmatpush1.bf16.msra.mxu0 0
      %830 = vmatprep.subr.bf16.mxu0 0
      %831 = vmatpush1.bf16.msra.mxu0 0
      %832 = vmatprep.subr.bf16.mxu0 0
      %833 = vmatpush1.bf16.msra.mxu0 0
      %834 = vmatprep.subr.bf16.mxu0 0
      %835 = vmatpush1.bf16.msra.mxu0 0
      %836 = vmatprep.subr.bf16.mxu0 0
      %837 = vmatpush1.bf16.msra.mxu0 0
      %838 = vmatprep.subr.bf16.mxu0 0
      %839 = vmatpush1.bf16.msra.mxu0 0
      %840 = vmatprep.subr.bf16.mxu0 0
      %841 = vmatpush1.bf16.msra.mxu0 0
      %842 = vmatprep.subr.bf16.mxu0 0
      %843 = vmatpush1.bf16.msra.mxu0 0
      %844 = vmatprep.subr.bf16.mxu0 0
      %845 = vmatpush1.bf16.msra.mxu0 0
      %846 = vmatprep.subr.bf16.mxu0 0
      %847 = vmatpush1.bf16.msra.mxu0 0
      %848 = vmatprep.subr.bf16.mxu0 0
      %849 = vmatpush1.bf16.msra.mxu0 0
      %850 = vmatprep.subr.bf16.mxu0 0
      %851 = vmatpush1.bf16.msra.mxu0 0
      %852 = vmatprep.subr.bf16.mxu0 0
      %853 = vmatpush1.bf16.msra.mxu0 0
      %854 = vmatprep.subr.bf16.mxu0 0
      %855 = vmatpush1.bf16.msra.mxu0 0
      %856 = vmatprep.mubr.bf16.mxu0 0
      %857 = vmatmul.mubr.bf16.gmra.mrb[0].mxu0 %v822
      %v858 = vpop.f32.mrb[0].mxu0
      %v859 = vadd.f32 0.0, %v858
      %v860 = vpop.f32.mrb[0].mxu0
      %v861 = vpop.f32.mrb[0].mxu0
      %v862 = vpop.f32.mrb[0].mxu0
      %863 = vdwg.mxu0
      %v864 = vadd.f32 %v553, %v859
      %v865 = vadd.f32 %v864, %v725
      %866 = vst.msk [vmem:[%s545] sm:$0xff] %vm674, %v865
      %v867 = vld [vmem:[%s10] sm:$0xf]
      %v868 = vld [vmem:[%s11] sm:$0xf]
      %v869 = vpack.c.bf16 %v868, %v868
      %v871 = vsel %vm729, %v869, 0
      %873 = vmatprep.subr.bf16.mxu0 0
      %874 = vmatpush1.bf16.msra.mxu0 %v728
      %875 = vmatprep.subr.bf16.mxu0 0
      %876 = vmatpush1.bf16.msra.mxu0 0
      %877 = vmatprep.subr.bf16.mxu0 0
      %878 = vmatpush1.bf16.msra.mxu0 0
      %879 = vmatprep.subr.bf16.mxu0 0
      %880 = vmatpush1.bf16.msra.mxu0 0
      %881 = vmatprep.subr.bf16.mxu0 0
      %882 = vmatpush1.bf16.msra.mxu0 0
      %883 = vmatprep.subr.bf16.mxu0 0
      %884 = vmatpush1.bf16.msra.mxu0 0
      %885 = vmatprep.subr.bf16.mxu0 0
      %886 = vmatpush1.bf16.msra.mxu0 0
      %887 = vmatprep.subr.bf16.mxu0 0
      %888 = vmatpush1.bf16.msra.mxu0 0
      %889 = vmatprep.subr.bf16.mxu0 0
      %890 = vmatpush1.bf16.msra.mxu0 0
      %891 = vmatprep.subr.bf16.mxu0 0
      %892 = vmatpush1.bf16.msra.mxu0 0
      %893 = vmatprep.subr.bf16.mxu0 0
      %894 = vmatpush1.bf16.msra.mxu0 0
      %895 = vmatprep.subr.bf16.mxu0 0
      %896 = vmatpush1.bf16.msra.mxu0 0
      %897 = vmatprep.subr.bf16.mxu0 0
      %898 = vmatpush1.bf16.msra.mxu0 0
      %899 = vmatprep.subr.bf16.mxu0 0
      %900 = vmatpush1.bf16.msra.mxu0 0
      %901 = vmatprep.subr.bf16.mxu0 0
      %902 = vmatpush1.bf16.msra.mxu0 0
      %903 = vmatprep.subr.bf16.mxu0 0
      %904 = vmatpush1.bf16.msra.mxu0 0
      %905 = vmatprep.mubr.bf16.mxu0 0
      %906 = vmatmul.mubr.bf16.gmra.mrb[0].mxu0 %v871
      %v907 = vpop.f32.mrb[0].mxu0
      %v908 = vadd.f32 0.0, %v907
      %v909 = vpop.f32.mrb[0].mxu0
      %v910 = vpop.f32.mrb[0].mxu0
      %v911 = vpop.f32.mrb[0].mxu0
      %912 = vdwg.mxu0
      %v913 = vadd.f32 %v554, %v908
      %v914 = vld [vmem:[%s12] sm:$0xf]
      %v915 = vpack.c.bf16 %v914, %v914
      %v917 = vsel %vm565, %v915, 0
      %919 = vmatprep.subr.bf16.mxu0 0
      %920 = vmatpush1.bf16.msra.mxu0 %v571
      %921 = vmatprep.subr.bf16.mxu0 0
      %922 = vmatpush1.bf16.msra.mxu0 0
      %923 = vmatprep.subr.bf16.mxu0 0
      %924 = vmatpush1.bf16.msra.mxu0 0
      %925 = vmatprep.subr.bf16.mxu0 0
      %926 = vmatpush1.bf16.msra.mxu0 0
      %927 = vmatprep.subr.bf16.mxu0 0
      %928 = vmatpush1.bf16.msra.mxu0 0
      %929 = vmatprep.subr.bf16.mxu0 0
      %930 = vmatpush1.bf16.msra.mxu0 0
      %931 = vmatprep.subr.bf16.mxu0 0
      %932 = vmatpush1.bf16.msra.mxu0 0
      %933 = vmatprep.subr.bf16.mxu0 0
      %934 = vmatpush1.bf16.msra.mxu0 0
      %935 = vmatprep.subr.bf16.mxu0 0
      %936 = vmatpush1.bf16.msra.mxu0 0
      %937 = vmatprep.subr.bf16.mxu0 0
      %938 = vmatpush1.bf16.msra.mxu0 0
      %939 = vmatprep.subr.bf16.mxu0 0
      %940 = vmatpush1.bf16.msra.mxu0 0
      %941 = vmatprep.subr.bf16.mxu0 0
      %942 = vmatpush1.bf16.msra.mxu0 0
      %943 = vmatprep.subr.bf16.mxu0 0
      %944 = vmatpush1.bf16.msra.mxu0 0
      %945 = vmatprep.subr.bf16.mxu0 0
      %946 = vmatpush1.bf16.msra.mxu0 0
      %947 = vmatprep.subr.bf16.mxu0 0
      %948 = vmatpush1.bf16.msra.mxu0 0
      %949 = vmatprep.subr.bf16.mxu0 0
      %950 = vmatpush1.bf16.msra.mxu0 0
      %951 = vmatprep.mubr.bf16.mxu0 0
      %952 = vmatmul.mubr.bf16.gmra.mrb[0].mxu0 %v917
      %v953 = vpop.f32.mrb[0].mxu0
      %v954 = vadd.f32 0.0, %v953
      %v955 = vpop.f32.mrb[0].mxu0
      %v956 = vpop.f32.mrb[0].mxu0
      %v957 = vpop.f32.mrb[0].mxu0
      %958 = vdwg.mxu0
      %v959 = vadd.f32 %v913, %v954
      %v960 = vpack.c.bf16 %v959, %v959
      %v962 = vsel %vm674, %v960, 0
      %964 = vmatprep.subr.bf16.mxu0 0
      %965 = vmatpush1.bf16.msra.mxu0 %v672
      %966 = vmatprep.subr.bf16.mxu0 0
      %967 = vmatpush1.bf16.msra.mxu0 %v673
      %968 = vmatprep.subr.bf16.mxu0 0
      %969 = vmatpush1.bf16.msra.mxu0 0
      %970 = vmatprep.subr.bf16.mxu0 0
      %971 = vmatpush1.bf16.msra.mxu0 0
      %972 = vmatprep.subr.bf16.mxu0 0
      %973 = vmatpush1.bf16.msra.mxu0 0
      %974 = vmatprep.subr.bf16.mxu0 0
      %975 = vmatpush1.bf16.msra.mxu0 0
      %976 = vmatprep.subr.bf16.mxu0 0
      %977 = vmatpush1.bf16.msra.mxu0 0
      %978 = vmatprep.subr.bf16.mxu0 0
      %979 = vmatpush1.bf16.msra.mxu0 0
      %980 = vmatprep.subr.bf16.mxu0 0
      %981 = vmatpush1.bf16.msra.mxu0 0
      %982 = vmatprep.subr.bf16.mxu0 0
      %983 = vmatpush1.bf16.msra.mxu0 0
      %984 = vmatprep.subr.bf16.mxu0 0
      %985 = vmatpush1.bf16.msra.mxu0 0
      %986 = vmatprep.subr.bf16.mxu0 0
      %987 = vmatpush1.bf16.msra.mxu0 0
      %988 = vmatprep.subr.bf16.mxu0 0
      %989 = vmatpush1.bf16.msra.mxu0 0
      %990 = vmatprep.subr.bf16.mxu0 0
      %991 = vmatpush1.bf16.msra.mxu0 0
      %992 = vmatprep.subr.bf16.mxu0 0
      %993 = vmatpush1.bf16.msra.mxu0 0
      %994 = vmatprep.subr.bf16.mxu0 0
      %995 = vmatpush1.bf16.msra.mxu0 0
      %996 = vmatprep.mubr.bf16.mxu0 0
      %997 = vmatmul.mubr.bf16.gmra.mrb[0].mxu0 %v962
      %v998 = vpop.f32.mrb[0].mxu0
      %v999 = vadd.f32 0.0, %v998
      %v1000 = vpop.f32.mrb[0].mxu0
      %v1001 = vpop.f32.mrb[0].mxu0
      %v1002 = vpop.f32.mrb[0].mxu0
      %1003 = vdwg.mxu0
      %v1004 = vadd.f32 %v554, %v999
      %v1005 = vadd.f32 %v1004, %v867
      %vm1006 = vcmask 257024
      %1007 = vst.msk [vmem:[%s549] sm:$0xf] %vm1006, %v1005
      %p1008 = scmp.lt.s32.totalorder %s27, 1
      %s1009 = scalar_select %p1008, %s27, 1
      %s1010 = smul.addr %s1009, 2
      %s1011 = smul.addr %s1010, 8
      %s1012 = scalar_lea.vmem %s13, %s1011
      %p1013 = scmp.lt.s32.totalorder %s27, 1
      %s1014 = scalar_select %p1013, %s27, 1
      %s1015 = smul.addr %s1014, 8
      %s1016 = scalar_lea.vmem %s14, %s1015
      %p1017 = scmp.lt.s32.totalorder %s27, 1
      %s1018 = scalar_select %p1017, %s27, 1
      %s1019 = smul.addr %s1018, 4
      %s1020 = scalar_lea.vmem %s15, %s1019
      // Predicated region
      $region73: #{timemixer_forward.5} parent=71 // pred_check
        %p1021 = pneg %p333
      $region74: #{timemixer_forward.5} parent=71 // pred_check_branch
        %1023 = sbr.rel (%p1021) target = $region76
      $region75: #{timemixer_forward.5} parent=71 // pred_region
        _
      $region76: #{timemixer_forward.5} parent=71 // pred_fallthru
        _
      // Predicated region
      $region77: #{timemixer_forward.5} parent=71 // pred_check
        %p1024 = pneg %p359
      $region78: #{timemixer_forward.5} parent=71 // pred_check_branch
        %1026 = sbr.rel (%p1024) target = $region80
      $region79: #{timemixer_forward.5} parent=71 // pred_region
        _
      $region80: #{timemixer_forward.5} parent=71 // pred_fallthru
        _
      // Predicated region
      $region81: #{timemixer_forward.5} parent=71 // pred_check
        %p1027 = pneg %p385
      $region82: #{timemixer_forward.5} parent=71 // pred_check_branch
        %1029 = sbr.rel (%p1027) target = $region84
      $region83: #{timemixer_forward.5} parent=71 // pred_region
        _
      $region84: #{timemixer_forward.5} parent=71 // pred_fallthru
        _
    $region72: #{timemixer_forward.5} parent=5 // pred_fallthru
      _
    %p1030 = scmp.le.s32.totalorder 2, %s22
    // Predicated region
    $region85: #{timemixer_forward.5} parent=5 // pred_check
      %p1031 = pneg %p1030
    $region86: #{timemixer_forward.5} parent=5 // pred_check_branch
      %1033 = sbr.rel (%p1031) target = $region88
    $region87: #{timemixer_forward.5} parent=5 // pred_region
      %s1034 = ssub.s32 %s22, 2
      // Predicated region
      $region89: #{timemixer_forward.5} parent=87 // pred_check
        %p1035 = pneg %p339
      $region90: #{timemixer_forward.5} parent=87 // pred_check_branch
        %1037 = sbr.rel (%p1035) target = $region92
      $region91: #{timemixer_forward.5} parent=87 // pred_region
        %p1038 = scmp.lt.s32.totalorder %s28, 1
        %s1039 = scalar_select %p1038, %s28, 1
        %s1040 = smul.addr %s1039, 2
        %s1041 = smul.addr %s1040, 8
        %s1042 = scalar_lea.vmem %s13, %s1041
      $region92: #{timemixer_forward.5} parent=87 // pred_fallthru
        _
      // Predicated region
      $region93: #{timemixer_forward.5} parent=87 // pred_check
        %p1043 = pneg %p365
      $region94: #{timemixer_forward.5} parent=87 // pred_check_branch
        %1045 = sbr.rel (%p1043) target = $region96
      $region95: #{timemixer_forward.5} parent=87 // pred_region
        %p1046 = scmp.lt.s32.totalorder %s28, 1
        %s1047 = scalar_select %p1046, %s28, 1
        %s1048 = smul.addr %s1047, 8
        %s1049 = scalar_lea.vmem %s14, %s1048
      $region96: #{timemixer_forward.5} parent=87 // pred_fallthru
        _
      // Predicated region
      $region97: #{timemixer_forward.5} parent=87 // pred_check
        %p1050 = pneg %p391
      $region98: #{timemixer_forward.5} parent=87 // pred_check_branch
        %1052 = sbr.rel (%p1050) target = $region100
      $region99: #{timemixer_forward.5} parent=87 // pred_region
        %p1053 = scmp.lt.s32.totalorder %s28, 1
        %s1054 = scalar_select %p1053, %s28, 1
        %s1055 = smul.addr %s1054, 4
        %s1056 = scalar_lea.vmem %s15, %s1055
      $region100: #{timemixer_forward.5} parent=87 // pred_fallthru
        _
    $region88: #{timemixer_forward.5} parent=5 // pred_fallthru
      _
  $region6: #{timemixer_forward.5} parent=0 // loop_footer
    %s26 = sadd.s32 1, %s22
  $region7: #{timemixer_forward.5} parent=0 // loop_footer_branch
    %21 = sbr.rel target = $region3
  $region8: #{timemixer_forward.5} parent=0 // loop_exit
    _

// kernel: timemixer_forward.7
$region0: #{timemixer_forward.7}
  #allocation0 [shape = 'u32[]', space=smem, size = 0x4, offset = 0x4, fixed_abs, tag = 'smem constant byte address 0x4 - core index']
  #allocation1 [shape = 'u32[144,128]{1,0:T(1,128)}', space=vmem, size = 0x12000, scoped, tag = 'internal scratch']
  %s0 = inlined_call_operand.vmem [shape: f32[2,16,32], index: 0, kind: input, shape index: {}]
  %s1 = inlined_call_operand.vmem [shape: f32[2,8,32], index: 1, kind: input, shape index: {}]
  %s2 = inlined_call_operand.vmem [shape: f32[2,4,32], index: 2, kind: input, shape index: {}]
  %s3 = inlined_call_operand.vmem [shape: f32[8,16], index: 3, kind: input, shape index: {}]
  %s4 = inlined_call_operand.vmem [shape: f32[8,8], index: 4, kind: input, shape index: {}]
  %s5 = inlined_call_operand.vmem [shape: f32[8,4], index: 5, kind: input, shape index: {}]
  %s6 = inlined_call_operand.vmem [shape: f32[32,4], index: 6, kind: input, shape index: {}]
  %s7 = inlined_call_operand.vmem [shape: f32[8,4], index: 7, kind: input, shape index: {}]
  %s8 = inlined_call_operand.vmem [shape: f32[2,8,4], index: 8, kind: output, shape index: {}]
  %s9 = sld [smem:[#allocation0]]
  $region65: #{timemixer_forward.7} parent=0
    _
  %s11 = ssub.s32 1, %s9
  %s12 = scalar_select 0, %s11, %s9
  loop: start=0, step=1, limit=4
  $region2: #{timemixer_forward.7} parent=0 // loop_pre_header
    _
  $region3: #{timemixer_forward.7} parent=0 // loop_header
    %s14 = sphi 0, %s18
    %p15 = scmp.ge.s32.totalorder %s14, 4
    %s24 = sphi 0, %s26
    %s27 = sphi 0, %s24
    %s28 = sphi 0, %s27
    %s44 = sphi 0, %s28
    %s50 = sphi 0, %s52
    %s53 = sphi 0, %s50
    %s54 = sphi 0, %s53
    %s70 = sphi 0, %s54
    %s76 = sphi 0, %s78
    %s79 = sphi 0, %s76
    %s80 = sphi 0, %s79
    %s96 = sphi 0, %s80
    %s100 = sphi 0, %s100
    %s102 = sphi 0, %s100
    %s103 = sphi 0, %s102
    %s117 = sphi 0, %s103
    %s121 = sphi 0, %s121
    %s123 = sphi 0, %s121
    %s124 = sphi 0, %s123
    %s138 = sphi 0, %s124
    %s142 = sphi 0, %s142
    %s144 = sphi 0, %s142
    %s145 = sphi 0, %s144
    %s159 = sphi 0, %s145
    %s163 = sphi 0, %s163
    %s165 = sphi 0, %s163
    %s166 = sphi 0, %s165
    %s180 = sphi 0, %s166
    %s184 = sphi 0, %s184
    %s186 = sphi 0, %s184
    %s187 = sphi 0, %s186
    %s201 = sphi 0, %s187
    %s207 = sphi 0, %s209
    %s210 = sphi 0, %s207
    %s211 = sphi 0, %s210
    %s227 = sphi 0, %s211
  $region4: #{timemixer_forward.7} parent=0 // loop_header_branch
    %17 = sbr.rel (%p15) target = $region8
  $region5: #{timemixer_forward.7} parent=0 // loop_body
    %s19 = ssub.s32 %s14, 1
    %s20 = ssub.s32 %s14, 2
    %s21 = sadd.s32 %s14, 1
    %s22 = ssub.s32 %s14, %s21
    %p23 = scmp.eq.s32.totalorder %s22, 0
    %s25 = sadd.s32 %s24, 1
    %s26 = scalar_select %p23, %s24, %s25
    %p29 = pneg %p23
    %p30 = scmp.eq.s32.totalorder %s14, 1
    %p31 = por %p29, %p30
    %p32 = scmp.ne.s32.totalorder %s24, %s27
    %p33 = scmp.eq.s32.totalorder %s14, 0
    %p34 = por %p32, %p33
    %p35 = scmp.ne.s32.totalorder %s24, %s27
    %p36 = scmp.eq.s32.totalorder %s19, 1
    %p37 = por %p35, %p36
    %p38 = scmp.ne.s32.totalorder %s27, %s28
    %p39 = scmp.eq.s32.totalorder %s19, 0
    %p40 = por %p38, %p39
    %p41 = scmp.ne.s32.totalorder %s27, %s28
    %p42 = scmp.eq.s32.totalorder %s20, 1
    %p43 = por %p41, %p42
    %p45 = scmp.ne.s32.totalorder %s28, %s44
    %p46 = scmp.eq.s32.totalorder %s20, 0
    %p47 = por %p45, %p46
    %s48 = ssub.s32 %s14, %s21
    %p49 = scmp.eq.s32.totalorder %s48, 0
    %s51 = sadd.s32 %s50, 1
    %s52 = scalar_select %p49, %s50, %s51
    %p55 = pneg %p49
    %p56 = scmp.eq.s32.totalorder %s14, 1
    %p57 = por %p55, %p56
    %p58 = scmp.ne.s32.totalorder %s50, %s53
    %p59 = scmp.eq.s32.totalorder %s14, 0
    %p60 = por %p58, %p59
    %p61 = scmp.ne.s32.totalorder %s50, %s53
    %p62 = scmp.eq.s32.totalorder %s19, 1
    %p63 = por %p61, %p62
    %p64 = scmp.ne.s32.totalorder %s53, %s54
    %p65 = scmp.eq.s32.totalorder %s19, 0
    %p66 = por %p64, %p65
    %p67 = scmp.ne.s32.totalorder %s53, %s54
    %p68 = scmp.eq.s32.totalorder %s20, 1
    %p69 = por %p67, %p68
    %p71 = scmp.ne.s32.totalorder %s54, %s70
    %p72 = scmp.eq.s32.totalorder %s20, 0
    %p73 = por %p71, %p72
    %s74 = ssub.s32 %s14, %s21
    %p75 = scmp.eq.s32.totalorder %s74, 0
    %s77 = sadd.s32 %s76, 1
    %s78 = scalar_select %p75, %s76, %s77
    %p81 = pneg %p75
    %p82 = scmp.eq.s32.totalorder %s14, 1
    %p83 = por %p81, %p82
    %p84 = scmp.ne.s32.totalorder %s76, %s79
    %p85 = scmp.eq.s32.totalorder %s14, 0
    %p86 = por %p84, %p85
    %p87 = scmp.ne.s32.totalorder %s76, %s79
    %p88 = scmp.eq.s32.totalorder %s19, 1
    %p89 = por %p87, %p88
    %p90 = scmp.ne.s32.totalorder %s79, %s80
    %p91 = scmp.eq.s32.totalorder %s19, 0
    %p92 = por %p90, %p91
    %p93 = scmp.ne.s32.totalorder %s79, %s80
    %p94 = scmp.eq.s32.totalorder %s20, 1
    %p95 = por %p93, %p94
    %p97 = scmp.ne.s32.totalorder %s80, %s96
    %p98 = scmp.eq.s32.totalorder %s20, 0
    %p99 = por %p97, %p98
    %s101 = sadd.s32 %s100, 1
    %p104 = scmp.eq.s32.totalorder %s14, 1
    %p105 = scmp.ne.s32.totalorder %s100, %s102
    %p106 = scmp.eq.s32.totalorder %s14, 0
    %p107 = por %p105, %p106
    %p108 = scmp.ne.s32.totalorder %s100, %s102
    %p109 = scmp.eq.s32.totalorder %s19, 1
    %p110 = por %p108, %p109
    %p111 = scmp.ne.s32.totalorder %s102, %s103
    %p112 = scmp.eq.s32.totalorder %s19, 0
    %p113 = por %p111, %p112
    %p114 = scmp.ne.s32.totalorder %s102, %s103
    %p115 = scmp.eq.s32.totalorder %s20, 1
    %p116 = por %p114, %p115
    %p118 = scmp.ne.s32.totalorder %s103, %s117
    %p119 = scmp.eq.s32.totalorder %s20, 0
    %p120 = por %p118, %p119
    %s122 = sadd.s32 %s121, 1
    %p125 = scmp.eq.s32.totalorder %s14, 1
    %p126 = scmp.ne.s32.totalorder %s121, %s123
    %p127 = scmp.eq.s32.totalorder %s14, 0
    %p128 = por %p126, %p127
    %p129 = scmp.ne.s32.totalorder %s121, %s123
    %p130 = scmp.eq.s32.totalorder %s19, 1
    %p131 = por %p129, %p130
    %p132 = scmp.ne.s32.totalorder %s123, %s124
    %p133 = scmp.eq.s32.totalorder %s19, 0
    %p134 = por %p132, %p133
    %p135 = scmp.ne.s32.totalorder %s123, %s124
    %p136 = scmp.eq.s32.totalorder %s20, 1
    %p137 = por %p135, %p136
    %p139 = scmp.ne.s32.totalorder %s124, %s138
    %p140 = scmp.eq.s32.totalorder %s20, 0
    %p141 = por %p139, %p140
    %s143 = sadd.s32 %s142, 1
    %p146 = scmp.eq.s32.totalorder %s14, 1
    %p147 = scmp.ne.s32.totalorder %s142, %s144
    %p148 = scmp.eq.s32.totalorder %s14, 0
    %p149 = por %p147, %p148
    %p150 = scmp.ne.s32.totalorder %s142, %s144
    %p151 = scmp.eq.s32.totalorder %s19, 1
    %p152 = por %p150, %p151
    %p153 = scmp.ne.s32.totalorder %s144, %s145
    %p154 = scmp.eq.s32.totalorder %s19, 0
    %p155 = por %p153, %p154
    %p156 = scmp.ne.s32.totalorder %s144, %s145
    %p157 = scmp.eq.s32.totalorder %s20, 1
    %p158 = por %p156, %p157
    %p160 = scmp.ne.s32.totalorder %s145, %s159
    %p161 = scmp.eq.s32.totalorder %s20, 0
    %p162 = por %p160, %p161
    %s164 = sadd.s32 %s163, 1
    %p167 = scmp.eq.s32.totalorder %s14, 1
    %p168 = scmp.ne.s32.totalorder %s163, %s165
    %p169 = scmp.eq.s32.totalorder %s14, 0
    %p170 = por %p168, %p169
    %p171 = scmp.ne.s32.totalorder %s163, %s165
    %p172 = scmp.eq.s32.totalorder %s19, 1
    %p173 = por %p171, %p172
    %p174 = scmp.ne.s32.totalorder %s165, %s166
    %p175 = scmp.eq.s32.totalorder %s19, 0
    %p176 = por %p174, %p175
    %p177 = scmp.ne.s32.totalorder %s165, %s166
    %p178 = scmp.eq.s32.totalorder %s20, 1
    %p179 = por %p177, %p178
    %p181 = scmp.ne.s32.totalorder %s166, %s180
    %p182 = scmp.eq.s32.totalorder %s20, 0
    %p183 = por %p181, %p182
    %s185 = sadd.s32 %s184, 1
    %p188 = scmp.eq.s32.totalorder %s14, 1
    %p189 = scmp.ne.s32.totalorder %s184, %s186
    %p190 = scmp.eq.s32.totalorder %s14, 0
    %p191 = por %p189, %p190
    %p192 = scmp.ne.s32.totalorder %s184, %s186
    %p193 = scmp.eq.s32.totalorder %s19, 1
    %p194 = por %p192, %p193
    %p195 = scmp.ne.s32.totalorder %s186, %s187
    %p196 = scmp.eq.s32.totalorder %s19, 0
    %p197 = por %p195, %p196
    %p198 = scmp.ne.s32.totalorder %s186, %s187
    %p199 = scmp.eq.s32.totalorder %s20, 1
    %p200 = por %p198, %p199
    %p202 = scmp.ne.s32.totalorder %s187, %s201
    %p203 = scmp.eq.s32.totalorder %s20, 0
    %p204 = por %p202, %p203
    %s205 = ssub.s32 %s14, %s21
    %p206 = scmp.eq.s32.totalorder %s205, 0
    %s208 = sadd.s32 %s207, 1
    %s209 = scalar_select %p206, %s207, %s208
    %p212 = pneg %p206
    %p213 = scmp.eq.s32.totalorder %s14, 1
    %p214 = por %p212, %p213
    %p215 = scmp.ne.s32.totalorder %s207, %s210
    %p216 = scmp.eq.s32.totalorder %s14, 0
    %p217 = por %p215, %p216
    %p218 = scmp.ne.s32.totalorder %s207, %s210
    %p219 = scmp.eq.s32.totalorder %s19, 1
    %p220 = por %p218, %p219
    %p221 = scmp.ne.s32.totalorder %s210, %s211
    %p222 = scmp.eq.s32.totalorder %s19, 0
    %p223 = por %p221, %p222
    %p224 = scmp.ne.s32.totalorder %s210, %s211
    %p225 = scmp.eq.s32.totalorder %s20, 1
    %p226 = por %p224, %p225
    %p228 = scmp.ne.s32.totalorder %s211, %s227
    %p229 = scmp.eq.s32.totalorder %s20, 0
    %p230 = por %p228, %p229
    %p231 = scmp.le.s32.totalorder 1, %s14
    %p232 = scmp.lt.s32.totalorder %s14, 3
    %p233 = pnand %p231, %p232
    %p234 = pneg %p233
    // Predicated region
    $region9: #{timemixer_forward.7} parent=5 // pred_check
      _
    $region10: #{timemixer_forward.7} parent=5 // pred_check_branch
      %236 = sbr.rel (%p233) target = $region12
    $region11: #{timemixer_forward.7} parent=5 // pred_region
      %s237 = ssub.s32 %s14, 1
      // Predicated region
      $region13: #{timemixer_forward.7} parent=11 // pred_check
        %p238 = pneg %p113
      $region14: #{timemixer_forward.7} parent=11 // pred_check_branch
        %240 = sbr.rel (%p238) target = $region16
      $region15: #{timemixer_forward.7} parent=11 // pred_region
        _
      $region16: #{timemixer_forward.7} parent=11 // pred_fallthru
        _
      // Predicated region
      $region17: #{timemixer_forward.7} parent=11 // pred_check
        %p241 = pneg %p134
      $region18: #{timemixer_forward.7} parent=11 // pred_check_branch
        %243 = sbr.rel (%p241) target = $region20
      $region19: #{timemixer_forward.7} parent=11 // pred_region
        _
      $region20: #{timemixer_forward.7} parent=11 // pred_fallthru
        _
      // Predicated region
      $region21: #{timemixer_forward.7} parent=11 // pred_check
        %p244 = pneg %p155
      $region22: #{timemixer_forward.7} parent=11 // pred_check_branch
        %246 = sbr.rel (%p244) target = $region24
      $region23: #{timemixer_forward.7} parent=11 // pred_region
        _
      $region24: #{timemixer_forward.7} parent=11 // pred_fallthru
        _
      // Predicated region
      $region25: #{timemixer_forward.7} parent=11 // pred_check
        %p247 = pneg %p176
      $region26: #{timemixer_forward.7} parent=11 // pred_check_branch
        %249 = sbr.rel (%p247) target = $region28
      $region27: #{timemixer_forward.7} parent=11 // pred_region
        _
      $region28: #{timemixer_forward.7} parent=11 // pred_fallthru
        _
      // Predicated region
      $region29: #{timemixer_forward.7} parent=11 // pred_check
        %p250 = pneg %p197
      $region30: #{timemixer_forward.7} parent=11 // pred_check_branch
        %252 = sbr.rel (%p250) target = $region32
      $region31: #{timemixer_forward.7} parent=11 // pred_region
        _
      $region32: #{timemixer_forward.7} parent=11 // pred_fallthru
        _
    $region12: #{timemixer_forward.7} parent=5 // pred_fallthru
      _
    %p253 = scmp.lt.s32.totalorder %s14, 2
    // Predicated region
    $region33: #{timemixer_forward.7} parent=5 // pred_check
      %p254 = pneg %p253
    $region34: #{timemixer_forward.7} parent=5 // pred_check_branch
      %256 = sbr.rel (%p254) target = $region36
    $region35: #{timemixer_forward.7} parent=5 // pred_region
      // Predicated region
      $region37: #{timemixer_forward.7} parent=35 // pred_check
        %p257 = pneg %p34
      $region38: #{timemixer_forward.7} parent=35 // pred_check_branch
        %259 = sbr.rel (%p257) target = $region40
      $region39: #{timemixer_forward.7} parent=35 // pred_region
        %p260 = scmp.lt.s32.totalorder %s14, 1
        %s261 = scalar_select %p260, %s14, 1
        %s262 = smul.addr %s261, 2
        %s263 = smul.addr %s262, 8
        %s264 = scalar_lea.vmem %s0, %s263
      $region40: #{timemixer_forward.7} parent=35 // pred_fallthru
        _
      // Predicated region
      $region41: #{timemixer_forward.7} parent=35 // pred_check
        %p265 = pneg %p60
      $region42: #{timemixer_forward.7} parent=35 // pred_check_branch
        %267 = sbr.rel (%p265) target = $region44
      $region43: #{timemixer_forward.7} parent=35 // pred_region
        %p268 = scmp.lt.s32.totalorder %s14, 1
        %s269 = scalar_select %p268, %s14, 1
        %s270 = smul.addr %s269, 8
        %s271 = scalar_lea.vmem %s1, %s270
      $region44: #{timemixer_forward.7} parent=35 // pred_fallthru
        _
      // Predicated region
      $region45: #{timemixer_forward.7} parent=35 // pred_check
        %p272 = pneg %p86
      $region46: #{timemixer_forward.7} parent=35 // pred_check_branch
        %274 = sbr.rel (%p272) target = $region48
      $region47: #{timemixer_forward.7} parent=35 // pred_region
        %p275 = scmp.lt.s32.totalorder %s14, 1
        %s276 = scalar_select %p275, %s14, 1
        %s277 = smul.addr %s276, 4
        %s278 = scalar_lea.vmem %s2, %s277
      $region48: #{timemixer_forward.7} parent=35 // pred_fallthru
        _
    $region36: #{timemixer_forward.7} parent=5 // pred_fallthru
      _
    %p279 = scmp.le.s32.totalorder 1, %s14
    %p280 = scmp.lt.s32.totalorder %s14, 3
    %p281 = pnand %p279, %p280
    %p282 = pneg %p281
    // Predicated region
    $region49: #{timemixer_forward.7} parent=5 // pred_check
      _
    $region50: #{timemixer_forward.7} parent=5 // pred_check_branch
      %284 = sbr.rel (%p281) target = $region52
    $region51: #{timemixer_forward.7} parent=5 // pred_region
      %s285 = ssub.s32 %s14, 1
      %p286 = scmp.lt.s32.totalorder %s19, 1
      %s287 = scalar_select %p286, %s19, 1
      %s288 = smul.addr %s287, 2
      %s289 = smul.addr %s288, 8
      %s290 = scalar_lea.vmem %s0, %s289
      %p291 = pneg %p40
      %p292 = pneg %p37
      %p293 = scmp.lt.s32.totalorder %s19, 1
      %s294 = scalar_select %p293, %s19, 1
      %s295 = smul.addr %s294, 8
      %s296 = scalar_lea.vmem %s1, %s295
      %p297 = pneg %p66
      %p298 = pneg %p63
      %p299 = scmp.lt.s32.totalorder %s19, 1
      %s300 = scalar_select %p299, %s19, 1
      %s301 = smul.addr %s300, 4
      %s302 = scalar_lea.vmem %s2, %s301
      %p303 = pneg %p92
      %p304 = pneg %p89
      %p305 = pneg %p113
      %p306 = pneg %p110
      %p307 = pneg %p134
      %p308 = pneg %p131
      %p309 = pneg %p155
      %p310 = pneg %p152
      %p311 = pneg %p176
      %p312 = pneg %p173
      %p313 = pneg %p197
      %p314 = pneg %p194
      %p315 = pneg %p223
      %p316 = pneg %p220
      %p317 = scmp.lt.s32.totalorder %s19, 1
      %s318 = scalar_select %p317, %s19, 1
      %s319 = smul.addr %s318, 8
      %s320 = scalar_lea.vmem %s8, %s319
      %p321 = scmp.lt.s32.totalorder %s19, 1
      %s322 = scalar_select %p321, %s19, 1
      %s323 = smul.addr %s322, 2
      %s324 = smul.addr %s323, 8
      %s325 = scalar_lea.vmem %s0, %s324
      %p326 = scmp.lt.s32.totalorder %s19, 1
      %s327 = scalar_select %p326, %s19, 1
      %s328 = smul.addr %s327, 8
      %s329 = scalar_lea.vmem %s1, %s328
      %p330 = scmp.lt.s32.totalorder %s19, 1
      %s331 = scalar_select %p330, %s19, 1
      %s332 = smul.addr %s331, 4
      %s333 = scalar_lea.vmem %s2, %s332
      %p334 = scmp.lt.s32.totalorder %s19, 1
      %s335 = scalar_select %p334, %s19, 1
      %s336 = smul.addr %s335, 8
      %s337 = scalar_lea.vmem %s8, %s336
      %v339 = vld [vmem:[%s3] sm:$0xff]
      %v340 = vld [vmem:[%s325] sm:$0xff]
      %v341 = vld [vmem:[%s325 + $0x8] sm:$0xff]
      %v342 = vpack.c.bf16 %v339, %v339
      %v343 = vpack.c.bf16 %v341, %v340
      %v344 = vld [vmem:[%s4] sm:$0xff]
      %v345 = vld [vmem:[%s329] sm:$0xff]
      %v346 = vpack.c.bf16 %v344, %v344
      %v347 = vpack.c.bf16 %v345, %v345
      %vm348 = vcmask 64512
      %v350 = vsel %vm348, %v346, 0
      %vm352 = vcmask 1043456
      %v354 = vsel %vm352, %v347, 0
      %356 = vmatprep.subr.bf16.mxu0 0
      %357 = vmatpush1.bf16.msra.mxu0 %v354
      %358 = vmatprep.subr.bf16.mxu0 0
      %359 = vmatpush1.bf16.msra.mxu0 0
      %360 = vmatprep.subr.bf16.mxu0 0
      %361 = vmatpush1.bf16.msra.mxu0 0
      %362 = vmatprep.subr.bf16.mxu0 0
      %363 = vmatpush1.bf16.msra.mxu0 0
      %364 = vmatprep.subr.bf16.mxu0 0
      %365 = vmatpush1.bf16.msra.mxu0 0
      %366 = vmatprep.subr.bf16.mxu0 0
      %367 = vmatpush1.bf16.msra.mxu0 0
      %368 = vmatprep.subr.bf16.mxu0 0
      %369 = vmatpush1.bf16.msra.mxu0 0
      %370 = vmatprep.subr.bf16.mxu0 0
      %371 = vmatpush1.bf16.msra.mxu0 0
      %372 = vmatprep.subr.bf16.mxu0 0
      %373 = vmatpush1.bf16.msra.mxu0 0
      %374 = vmatprep.subr.bf16.mxu0 0
      %375 = vmatpush1.bf16.msra.mxu0 0
      %376 = vmatprep.subr.bf16.mxu0 0
      %377 = vmatpush1.bf16.msra.mxu0 0
      %378 = vmatprep.subr.bf16.mxu0 0
      %379 = vmatpush1.bf16.msra.mxu0 0
      %380 = vmatprep.subr.bf16.mxu0 0
      %381 = vmatpush1.bf16.msra.mxu0 0
      %382 = vmatprep.subr.bf16.mxu0 0
      %383 = vmatpush1.bf16.msra.mxu0 0
      %384 = vmatprep.subr.bf16.mxu0 0
      %385 = vmatpush1.bf16.msra.mxu0 0
      %386 = vmatprep.subr.bf16.mxu0 0
      %387 = vmatpush1.bf16.msra.mxu0 0
      %388 = vmatprep.mubr.bf16.mxu0 0
      %389 = vmatmul.mubr.bf16.gmra.mrb[0].mxu0 %v350
      %v390 = vpop.f32.mrb[0].mxu0
      %v391 = vadd.f32 0.0, %v390
      %v392 = vpop.f32.mrb[0].mxu0
      %v393 = vpop.f32.mrb[0].mxu0
      %v394 = vpop.f32.mrb[0].mxu0
      %395 = vdwg.mxu0
      %vm396 = vcmask 130048
      %v398 = vsel %vm396, %v342, 0
      %400 = vmatprep.subr.bf16.mxu0 0
      %401 = vmatpush1.bf16.msra.mxu0 %v343
      %402 = vmatprep.subr.bf16.mxu0 0
      %403 = vmatpush1.bf16.msra.mxu0 0
      %404 = vmatprep.subr.bf16.mxu0 0
      %405 = vmatpush1.bf16.msra.mxu0 0
      %406 = vmatprep.subr.bf16.mxu0 0
      %407 = vmatpush1.bf16.msra.mxu0 0
      %408 = vmatprep.subr.bf16.mxu0 0
      %409 = vmatpush1.bf16.msra.mxu0 0
      %410 = vmatprep.subr.bf16.mxu0 0
      %411 = vmatpush1.bf16.msra.mxu0 0
      %412 = vmatprep.subr.bf16.mxu0 0
      %413 = vmatpush1.bf16.msra.mxu0 0
      %414 = vmatprep.subr.bf16.mxu0 0
      %415 = vmatpush1.bf16.msra.mxu0 0
      %416 = vmatprep.subr.bf16.mxu0 0
      %417 = vmatpush1.bf16.msra.mxu0 0
      %418 = vmatprep.subr.bf16.mxu0 0
      %419 = vmatpush1.bf16.msra.mxu0 0
      %420 = vmatprep.subr.bf16.mxu0 0
      %421 = vmatpush1.bf16.msra.mxu0 0
      %422 = vmatprep.subr.bf16.mxu0 0
      %423 = vmatpush1.bf16.msra.mxu0 0
      %424 = vmatprep.subr.bf16.mxu0 0
      %425 = vmatpush1.bf16.msra.mxu0 0
      %426 = vmatprep.subr.bf16.mxu0 0
      %427 = vmatpush1.bf16.msra.mxu0 0
      %428 = vmatprep.subr.bf16.mxu0 0
      %429 = vmatpush1.bf16.msra.mxu0 0
      %430 = vmatprep.subr.bf16.mxu0 0
      %431 = vmatpush1.bf16.msra.mxu0 0
      %432 = vmatprep.mubr.bf16.mxu0 0
      %433 = vmatmul.mubr.bf16.gmra.mrb[0].mxu0 %v398
      %v434 = vpop.f32.mrb[0].mxu0
      %v435 = vadd.f32 %v391, %v434
      %v436 = vpop.f32.mrb[0].mxu0
      %v437 = vpop.f32.mrb[0].mxu0
      %v438 = vpop.f32.mrb[0].mxu0
      %439 = vdwg.mxu0
      %v440 = vld [vmem:[%s5] sm:$0xff]
      %v441 = vld [vmem:[%s333] sm:$0xf]
      %v442 = vpack.c.bf16 %v440, %v440
      %v443 = vpack.c.bf16 %v441, %v441
      %vm444 = vcmask 31744
      %v446 = vsel %vm444, %v442, 0
      %vm448 = vcmask 1041408
      %v450 = vsel %vm448, %v443, 0
      %452 = vmatprep.subr.bf16.mxu0 0
      %453 = vmatpush1.bf16.msra.mxu0 %v450
      %454 = vmatprep.subr.bf16.mxu0 0
      %455 = vmatpush1.bf16.msra.mxu0 0
      %456 = vmatprep.subr.bf16.mxu0 0
      %457 = vmatpush1.bf16.msra.mxu0 0
      %458 = vmatprep.subr.bf16.mxu0 0
      %459 = vmatpush1.bf16.msra.mxu0 0
      %460 = vmatprep.subr.bf16.mxu0 0
      %461 = vmatpush1.bf16.msra.mxu0 0
      %462 = vmatprep.subr.bf16.mxu0 0
      %463 = vmatpush1.bf16.msra.mxu0 0
      %464 = vmatprep.subr.bf16.mxu0 0
      %465 = vmatpush1.bf16.msra.mxu0 0
      %466 = vmatprep.subr.bf16.mxu0 0
      %467 = vmatpush1.bf16.msra.mxu0 0
      %468 = vmatprep.subr.bf16.mxu0 0
      %469 = vmatpush1.bf16.msra.mxu0 0
      %470 = vmatprep.subr.bf16.mxu0 0
      %471 = vmatpush1.bf16.msra.mxu0 0
      %472 = vmatprep.subr.bf16.mxu0 0
      %473 = vmatpush1.bf16.msra.mxu0 0
      %474 = vmatprep.subr.bf16.mxu0 0
      %475 = vmatpush1.bf16.msra.mxu0 0
      %476 = vmatprep.subr.bf16.mxu0 0
      %477 = vmatpush1.bf16.msra.mxu0 0
      %478 = vmatprep.subr.bf16.mxu0 0
      %479 = vmatpush1.bf16.msra.mxu0 0
      %480 = vmatprep.subr.bf16.mxu0 0
      %481 = vmatpush1.bf16.msra.mxu0 0
      %482 = vmatprep.subr.bf16.mxu0 0
      %483 = vmatpush1.bf16.msra.mxu0 0
      %484 = vmatprep.mubr.bf16.mxu0 0
      %485 = vmatmul.mubr.bf16.gmra.mrb[0].mxu0 %v446
      %v486 = vpop.f32.mrb[0].mxu0
      %v487 = vadd.f32 0.0, %v486
      %v488 = vpop.f32.mrb[0].mxu0
      %v489 = vpop.f32.mrb[0].mxu0
      %v490 = vpop.f32.mrb[0].mxu0
      %491 = vdwg.mxu0
      %v492 = vadd.f32 %v435, %v487
      %v493 = vld [vmem:[%s6] sm:$0xff]
      %v494 = vld [vmem:[%s6 + $0x8] sm:$0xff]
      %v495 = vld [vmem:[%s6 + $0x10] sm:$0xff]
      %v496 = vld [vmem:[%s6 + $0x18] sm:$0xff]
      %v497 = vpack.c.bf16 %v492, %v492
      %v498 = vpack.c.bf16 %v494, %v493
      %v499 = vpack.c.bf16 %v496, %v495
      %v500 = vld [vmem:[%s7] sm:$0xff]
      %vm501 = vcmask 261120
      %v503 = vsel %vm501, %v497, 0
      %505 = vmatprep.subr.bf16.mxu0 0
      %506 = vmatpush1.bf16.msra.mxu0 %v498
      %507 = vmatprep.subr.bf16.mxu0 0
      %508 = vmatpush1.bf16.msra.mxu0 %v499
      %509 = vmatprep.subr.bf16.mxu0 0
      %510 = vmatpush1.bf16.msra.mxu0 0
      %511 = vmatprep.subr.bf16.mxu0 0
      %512 = vmatpush1.bf16.msra.mxu0 0
      %513 = vmatprep.subr.bf16.mxu0 0
      %514 = vmatpush1.bf16.msra.mxu0 0
      %515 = vmatprep.subr.bf16.mxu0 0
      %516 = vmatpush1.bf16.msra.mxu0 0
      %517 = vmatprep.subr.bf16.mxu0 0
      %518 = vmatpush1.bf16.msra.mxu0 0
      %519 = vmatprep.subr.bf16.mxu0 0
      %520 = vmatpush1.bf16.msra.mxu0 0
      %521 = vmatprep.subr.bf16.mxu0 0
      %522 = vmatpush1.bf16.msra.mxu0 0
      %523 = vmatprep.subr.bf16.mxu0 0
      %524 = vmatpush1.bf16.msra.mxu0 0
      %525 = vmatprep.subr.bf16.mxu0 0
      %526 = vmatpush1.bf16.msra.mxu0 0
      %527 = vmatprep.subr.bf16.mxu0 0
      %528 = vmatpush1.bf16.msra.mxu0 0
      %529 = vmatprep.subr.bf16.mxu0 0
      %530 = vmatpush1.bf16.msra.mxu0 0
      %531 = vmatprep.subr.bf16.mxu0 0
      %532 = vmatpush1.bf16.msra.mxu0 0
      %533 = vmatprep.subr.bf16.mxu0 0
      %534 = vmatpush1.bf16.msra.mxu0 0
      %535 = vmatprep.subr.bf16.mxu0 0
      %536 = vmatpush1.bf16.msra.mxu0 0
      %537 = vmatprep.mubr.bf16.mxu0 0
      %538 = vmatmul.mubr.bf16.gmra.mrb[0].mxu0 %v503
      %v539 = vpop.f32.mrb[0].mxu0
      %v540 = vadd.f32 %v500, %v539
      %v541 = vpop.f32.mrb[0].mxu0
      %v542 = vpop.f32.mrb[0].mxu0
      %v543 = vpop.f32.mrb[0].mxu0
      %544 = vdwg.mxu0
      %545 = vst.msk [vmem:[%s337] sm:$0xff] %vm444, %v540
      %p546 = scmp.lt.s32.totalorder %s19, 1
      %s547 = scalar_select %p546, %s19, 1
      %s548 = smul.addr %s547, 8
      %s549 = scalar_lea.vmem %s8, %s548
      // Predicated region
      $region53: #{timemixer_forward.7} parent=51 // pred_check
        %p550 = pneg %p220
      $region54: #{timemixer_forward.7} parent=51 // pred_check_branch
        %552 = sbr.rel (%p550) target = $region56
      $region55: #{timemixer_forward.7} parent=51 // pred_region
        _
      $region56: #{timemixer_forward.7} parent=51 // pred_fallthru
        _
    $region52: #{timemixer_forward.7} parent=5 // pred_fallthru
      _
    %p553 = scmp.le.s32.totalorder 2, %s14
    // Predicated region
    $region57: #{timemixer_forward.7} parent=5 // pred_check
      %p554 = pneg %p553
    $region58: #{timemixer_forward.7} parent=5 // pred_check_branch
      %556 = sbr.rel (%p554) target = $region60
    $region59: #{timemixer_forward.7} parent=5 // pred_region
      %s557 = ssub.s32 %s14, 2
      // Predicated region
      $region61: #{timemixer_forward.7} parent=59 // pred_check
        %p558 = pneg %p226
      $region62: #{timemixer_forward.7} parent=59 // pred_check_branch
        %560 = sbr.rel (%p558) target = $region64
      $region63: #{timemixer_forward.7} parent=59 // pred_region
        %p561 = scmp.lt.s32.totalorder %s20, 1
        %s562 = scalar_select %p561, %s20, 1
        %s563 = smul.addr %s562, 8
        %s564 = scalar_lea.vmem %s8, %s563
      $region64: #{timemixer_forward.7} parent=59 // pred_fallthru
        _
    $region60: #{timemixer_forward.7} parent=5 // pred_fallthru
      _
  $region6: #{timemixer_forward.7} parent=0 // loop_footer
    %s18 = sadd.s32 1, %s14
  $region7: #{timemixer_forward.7} parent=0 // loop_footer_branch
    %13 = sbr.rel target = $region3
  $region8: #{timemixer_forward.7} parent=0 // loop_exit
    _

</llo_original>
